<compile_context>
chip_gen: v7x
topology: tpu7x:2x2x1
jax: 0.10.0
libtpu: 0.0.40
codegen_flags: <defaults>
</compile_context>

<pallas_src>
import functools

import jax
import jax.numpy as jnp
from jax.experimental import pallas as pl
from jax.experimental.pallas import tpu as pltpu


def _round_up(x, m):
    return ((x + m - 1) // m) * m


def _circle_loss_kernel(bi_ref, bj_ref, fi_ref, fj_ref, lcol_ref, lrows_ref,
                        out_ref, mp_ref, sp_ref, mn_ref, sn_ref,
                        *, margin, gamma, bs, tile, pad_batch):
    t = pl.program_id(0)
    bi = bi_ref[t]          # block-row index of this grid step
    bj = bj_ref[t]          # block-col index of this grid step (bj >= bi)
    neg_inf = jnp.float32(-jnp.inf)

    @pl.when(t == 0)
    def _init():
        mp_ref[...] = jnp.full_like(mp_ref, neg_inf)   # per-lane running max (pos)
        sp_ref[...] = jnp.zeros_like(sp_ref)           # per-lane running sum (pos)
        mn_ref[...] = jnp.full_like(mn_ref, neg_inf)   # per-lane running max (neg)
        sn_ref[...] = jnp.zeros_like(sn_ref)           # per-lane running sum (neg)
        out_ref[0, 0] = jnp.float32(0.0)

    # ---- similarity tile: fi @ fj.T (contract dim 1 of both; no transpose). ----
    # Inputs go to the MXU in their own dtype (bf16-native on v6e/v7x), f32 acc.
    sim = jax.lax.dot_general(
        fi_ref[...], fj_ref[...], (((1,), (1,)), ((), ())),
        preferred_element_type=jnp.float32)            # [tile, tile] f32

    # ---- masks ------------------------------------------------------------------
    r_loc = jax.lax.broadcasted_iota(jnp.int32, (tile, 1), 0)   # local row ids
    c_loc = jax.lax.broadcasted_iota(jnp.int32, (1, tile), 1)   # local col ids
    # strict upper triangle; trivially true for every off-diagonal (bj > bi) block
    valid = jnp.logical_or(bj > bi, c_loc > r_loc)              # [tile, tile]
    if pad_batch:   # only compiled in when bs was padded up to bs_p
        valid = jnp.logical_and(valid, r_loc < (bs - bi * tile))
        valid = jnp.logical_and(valid, c_loc < (bs - bj * tile))

    lrow = lrows_ref[pl.ds(bj, 1), :]                  # (1, tile) labels of col block
    eq = lcol_ref[...] == lrow                         # (tile, tile) bool

    # ---- circle-loss logits -------------------------------------------------------
    ap = jnp.maximum(-sim + (1.0 + margin), 0.0)       # clamp_min(-sp + 1 + m, 0)
    an = jnp.maximum(sim + margin, 0.0)                # clamp_min(sn + m, 0)
    logit_p = (-gamma) * ap * (sim - (1.0 - margin))
    logit_n = gamma * an * (sim - margin)

    x_p = jnp.where(jnp.logical_and(eq, valid), logit_p, neg_inf)
    x_n = jnp.where(jnp.logical_and(jnp.logical_not(eq), valid), logit_n, neg_inf)

    # ---- streaming, per-lane masked logsumexp (sublane reductions only) ----------
    mp_old = mp_ref[...]                               # (1, tile)
    mn_old = mn_ref[...]
    mp_new = jnp.maximum(mp_old, jnp.max(x_p, axis=0, keepdims=True))
    mn_new = jnp.maximum(mn_old, jnp.max(x_n, axis=0, keepdims=True))
    mp_safe = jnp.where(mp_new > neg_inf, mp_new, 0.0)
    mn_safe = jnp.where(mn_new > neg_inf, mn_new, 0.0)

    # pos/neg entries are disjoint and masked entries are -inf, so one fused exp
    # over a single [tile, tile] matrix suffices (masked -> exp(-inf) = 0).
    e = jnp.exp(jnp.where(eq, x_p - mp_safe, x_n - mn_safe))
    sum_p = jnp.sum(jnp.where(eq, e, 0.0), axis=0, keepdims=True)
    sum_n = jnp.sum(jnp.where(eq, 0.0, e), axis=0, keepdims=True)   # own masked sum

    sp_ref[...] = sp_ref[...] * jnp.exp(mp_old - mp_safe) + sum_p
    sn_ref[...] = sn_ref[...] * jnp.exp(mn_old - mn_safe) + sum_n
    mp_ref[...] = mp_new
    mn_ref[...] = mn_new

    @pl.when(t == pl.num_programs(0) - 1)
    def _finalize():
        mp = mp_ref[...]
        mn = mn_ref[...]
        # Combine per-lane (max, sum) states: the only cross-lane reductions in the
        # whole kernel happen here, once.
        gmp = jnp.max(mp)
        gmn = jnp.max(mn)
        gmp_safe = jnp.where(gmp > neg_inf, gmp, 0.0)
        gmn_safe = jnp.where(gmn > neg_inf, gmn, 0.0)
        tot_p = jnp.sum(sp_ref[...] * jnp.exp(mp - gmp_safe))
        tot_n = jnp.sum(sn_ref[...] * jnp.exp(mn - gmn_safe))
        lse_p = gmp_safe + jnp.log(tot_p)              # -inf if there is no positive pair
        lse_n = gmn_safe + jnp.log(tot_n)              # -inf if there is no negative pair
        z = lse_p + lse_n
        # numerically-stable softplus (matches nn.Softplus threshold=20 behavior)
        loss = jnp.where(z > 20.0, z, jnp.log1p(jnp.exp(jnp.minimum(z, 20.0))))
        out_ref[0, 0] = loss


def circle_loss(normed_features, labels, *, margin=0.25, gamma=256.0, block=256):
    """normed_features: [bs, feat] float; labels: [bs] int. Returns scalar loss."""
    bs, feat = normed_features.shape
    assert block % 128 == 0, "block must be a multiple of 128 (lane width)"

    # tile is a multiple of 128 so all offsets stay aligned; 256 is MXU-native on
    # v6e/v7x, 2x128 on v5e.
    tile = min(block, _round_up(bs, 128))
    bs_p = _round_up(bs, tile)
    feat_p = _round_up(feat, 128)
    pad_batch = bs_p != bs

    # Zero-pad features (zeros don't change dot products). Padded rows/cols are
    # excluded inside the kernel by the validity mask (only compiled in if needed).
    f = jnp.pad(normed_features, ((0, bs_p - bs), (0, feat_p - feat)))
    lab = jnp.pad(labels.astype(jnp.int32), (0, bs_p - bs))
    lcol = lab.reshape(bs_p, 1)                 # row-block labels, tiled (tile, 1)
    g = bs_p // tile
    lrows = lab.reshape(g, tile)                # all column-block label rows, resident once

    # Triangular grid: only the g*(g+1)/2 upper-triangular blocks are visited.
    pairs = [(i, j) for i in range(g) for j in range(i, g)]
    bi_arr = jnp.asarray([p[0] for p in pairs], dtype=jnp.int32)
    bj_arr = jnp.asarray([p[1] for p in pairs], dtype=jnp.int32)
    num_steps = len(pairs)

    kernel = functools.partial(
        _circle_loss_kernel, margin=float(margin), gamma=float(gamma),
        bs=bs, tile=tile, pad_batch=pad_batch)

    # Rough VMEM working set (double-buffered fi/fj tiles dominate); raise the
    # scoped limit only when needed and keep it v7x-safe (< 64 MiB physical).
    itemsize = f.dtype.itemsize
    vmem_est = (2 * 2 * tile * feat_p * itemsize      # fi + fj, double-buffered
                + 2 * tile * 128 * 4                  # lcol (lane-padded)
                + _round_up(g, 8) * tile * 4          # lrows (resident once)
                + 4 * 8 * tile * 4                    # (1, tile) accumulators
                + 8 * tile * tile * 4)                # elementwise temporaries
    cparams = dict(
        # Online-logsumexp accumulators carry across the whole grid -> sequential.
        dimension_semantics=("arbitrary",),
    )
    if vmem_est > 24 * 2 ** 20:
        cparams["vmem_limit_bytes"] = int(
            min(max(1.5 * vmem_est, 32 * 2 ** 20), 60 * 2 ** 20))

    out = pl.pallas_call(
        kernel,
        out_shape=jax.ShapeDtypeStruct((1, 1), jnp.float32),
        grid_spec=pltpu.PrefetchScalarGridSpec(
            num_scalar_prefetch=2,
            grid=(num_steps,),
            in_specs=[
                pl.BlockSpec((tile, feat_p), lambda t, bi, bj: (bi[t], 0)),  # row feats
                pl.BlockSpec((tile, feat_p), lambda t, bi, bj: (bj[t], 0)),  # col feats
                pl.BlockSpec((tile, 1), lambda t, bi, bj: (bi[t], 0)),       # labels col
                pl.BlockSpec((g, tile), lambda t, bi, bj: (0, 0)),           # all label rows
            ],
            out_specs=pl.BlockSpec((1, 1), lambda t, bi, bj: (0, 0),
                                   memory_space=pltpu.MemorySpace.SMEM),
            scratch_shapes=[pltpu.VMEM((1, tile), jnp.float32)] * 4,
        ),
        compiler_params=pltpu.CompilerParams(**cparams),
    )(bi_arr, bj_arr, f, f, lcol, lrows)
    return out[0, 0]


def _reference_circle_loss(features, labels, *, margin, gamma):
    """Pure-JAX reference of the PyTorch forward (for a correctness check)."""
    sim = jnp.matmul(features, features.T, precision=jax.lax.Precision.HIGHEST)
    eq = labels[:, None] == labels[None, :]
    triu = jnp.triu(jnp.ones(sim.shape, dtype=bool), k=1)
    pos = jnp.logical_and(eq, triu)
    neg = jnp.logical_and(jnp.logical_not(eq), triu)
    ap = jnp.maximum(-sim + 1.0 + margin, 0.0)
    an = jnp.maximum(sim + margin, 0.0)
    logit_p = -ap * (sim - (1.0 - margin)) * gamma
    logit_n = an * (sim - margin) * gamma
    lse_p = jax.nn.logsumexp(jnp.where(pos, logit_p, -jnp.inf))
    lse_n = jax.nn.logsumexp(jnp.where(neg, logit_n, -jnp.inf))
    return jax.nn.softplus(lse_p + lse_n)


if __name__ == "__main__":
    key = jax.random.PRNGKey(0)
    k_feat, k_lab = jax.random.split(key)

    bs, feat = 160, 64
    x = jax.random.uniform(k_feat, (bs, feat), dtype=jnp.float32)
    features = x / jnp.linalg.norm(x, axis=1, keepdims=True)   # F.normalize
    labels = jax.random.randint(k_lab, (bs,), 0, 10, dtype=jnp.int32)

    # block=128 -> bs padded to 256, g=2, triangular grid of 3 blocks: exercises
    # diag/off-diag masking, the online per-lane logsumexp carry and the
    # batch/feature padding paths.
    loss = circle_loss(features, labels, margin=0.25, gamma=256.0, block=128)
    jax.block_until_ready(loss)

    ref = _reference_circle_loss(features, labels, margin=0.25, gamma=256.0)
    assert bool(jnp.isfinite(loss)), float(loss)
    assert bool(jnp.allclose(loss, ref, rtol=2e-2, atol=2e-2)), (float(loss), float(ref))
    print("KERNEL_OK")
</pallas_src>

<mosaic_0001>
module attributes {stable_mosaic.version = 11 : i64} {
  func.func @_circle_loss_kernel(%arg0: i32, %arg1: memref<3xi32, #tpu.memory_space<smem>>, %arg2: memref<3xi32, #tpu.memory_space<smem>>, %arg3: memref<128x128xf32, #tpu.memory_space<vmem>>, %arg4: memref<128x128xf32, #tpu.memory_space<vmem>>, %arg5: memref<128x1xi32, #tpu.memory_space<vmem>>, %arg6: memref<2x128xi32, #tpu.memory_space<vmem>>, %arg7: memref<1x1xf32, #tpu.memory_space<smem>>, %arg8: memref<1x128xf32, #tpu.memory_space<vmem>>, %arg9: memref<1x128xf32, #tpu.memory_space<vmem>>, %arg10: memref<1x128xf32, #tpu.memory_space<vmem>>, %arg11: memref<1x128xf32, #tpu.memory_space<vmem>>) attributes {dimension_semantics = [#tpu.dimension_semantics<arbitrary>], iteration_bounds = array<i64: 3>, scalar_prefetch = 2 : i64, scratch_operands = 4 : i64, tpu.core_type = #tpu.core_type<tc>, window_params = [{transform_indices = @transform_0, window_bounds = array<i64: 128, 128>}, {transform_indices = @transform_1, window_bounds = array<i64: 128, 128>}, {transform_indices = @transform_2, window_bounds = array<i64: 128, 1>}, {pipeline_mode = #tpu.pipeline_mode<synchronous>, transform_indices = @transform_3, window_bounds = array<i64: 2, 128>}, {transform_indices = @transform_4, window_bounds = array<i64: 1, 1>}]} {
    %0 = arith.index_cast %arg0 : i32 to index
    %1 = memref.load %arg1[%0] : memref<3xi32, #tpu.memory_space<smem>>
    %2 = arith.index_cast %arg0 : i32 to index
    %3 = memref.load %arg2[%2] : memref<3xi32, #tpu.memory_space<smem>>
    %c0_i32 = arith.constant 0 : i32
    %4 = arith.cmpi eq, %arg0, %c0_i32 : i32
    %5 = arith.extui %4 : i1 to i32
    %cst = arith.constant 0xFF800000 : f32
    %c0_i32_0 = arith.constant 0 : i32
    %6 = arith.cmpi ne, %5, %c0_i32_0 : i32
    scf.if %6 {
      %110 = vector.broadcast %cst : f32 to vector<1x128xf32>
      %c0_50 = arith.constant 0 : index
      %c0_51 = arith.constant 0 : index
      %111 = vector.load %arg8[%c0_50, %c0_51] : memref<1x128xf32, #tpu.memory_space<vmem>>, vector<1x128xf32>
      tpu.vector_store %arg8[%c0_50, %c0_51], %110 {strides = array<i32>} : memref<1x128xf32, #tpu.memory_space<vmem>>, vector<1x128xf32>,
      %cst_52 = arith.constant 0.000000e+00 : f32
      %112 = vector.broadcast %cst_52 : f32 to vector<1x128xf32>
      %c0_53 = arith.constant 0 : index
      %c0_54 = arith.constant 0 : index
      %113 = vector.load %arg9[%c0_53, %c0_54] : memref<1x128xf32, #tpu.memory_space<vmem>>, vector<1x128xf32>
      tpu.vector_store %arg9[%c0_53, %c0_54], %112 {strides = array<i32>} : memref<1x128xf32, #tpu.memory_space<vmem>>, vector<1x128xf32>,
      %114 = vector.broadcast %cst : f32 to vector<1x128xf32>
      %c0_55 = arith.constant 0 : index
      %c0_56 = arith.constant 0 : index
      %115 = vector.load %arg10[%c0_55, %c0_56] : memref<1x128xf32, #tpu.memory_space<vmem>>, vector<1x128xf32>
      tpu.vector_store %arg10[%c0_55, %c0_56], %114 {strides = array<i32>} : memref<1x128xf32, #tpu.memory_space<vmem>>, vector<1x128xf32>,
      %cst_57 = arith.constant 0.000000e+00 : f32
      %116 = vector.broadcast %cst_57 : f32 to vector<1x128xf32>
      %c0_58 = arith.constant 0 : index
      %c0_59 = arith.constant 0 : index
      %117 = vector.load %arg11[%c0_58, %c0_59] : memref<1x128xf32, #tpu.memory_space<vmem>>, vector<1x128xf32>
      tpu.vector_store %arg11[%c0_58, %c0_59], %116 {strides = array<i32>} : memref<1x128xf32, #tpu.memory_space<vmem>>, vector<1x128xf32>,
      %cst_60 = arith.constant 0.000000e+00 : f32
      %c0_61 = arith.constant 0 : index
      %c0_62 = arith.constant 0 : index
      %118 = memref.load %arg7[%c0_61, %c0_62] : memref<1x1xf32, #tpu.memory_space<smem>>
      memref.store %cst_60, %arg7[%c0_61, %c0_62] : memref<1x1xf32, #tpu.memory_space<smem>>
    } else {
    }
    %c0 = arith.constant 0 : index
    %c0_1 = arith.constant 0 : index
    %7 = vector.load %arg3[%c0, %c0_1] : memref<128x128xf32, #tpu.memory_space<vmem>>, vector<128x128xf32>
    %c0_2 = arith.constant 0 : index
    %c0_3 = arith.constant 0 : index
    %8 = vector.load %arg4[%c0_2, %c0_3] : memref<128x128xf32, #tpu.memory_space<vmem>>, vector<128x128xf32>
    %cst_4 = arith.constant dense<0.000000e+00> : vector<128x128xf32>
    %9 = tpu.matmul %7, %8, %cst_4 {dimension_numbers = #tpu.dot_dimension_numbers<[1], [1], [0], [0], [0, 0, 1, 0], [], []>} : vector<128x128xf32>, vector<128x128xf32>, vector<128x128xf32> -> vector<128x128xf32>
    %10 = tpu.iota {dimensions = array<i32: 0>} : vector<128x1xi32>
    %11 = tpu.iota {dimensions = array<i32: 1>} : vector<1x128xi32>
    %12 = arith.cmpi sgt, %3, %1 : i32
    %13 = vector.broadcast %11 : vector<1x128xi32> to vector<128x128xi32>
    %14 = vector.broadcast %10 : vector<128x1xi32> to vector<128x128xi32>
    %15 = arith.cmpi sgt, %13, %14 : vector<128x128xi32>
    %16 = vector.broadcast %12 : i1 to vector<128x128xi1>
    %17 = arith.ori %16, %15 : vector<128x128xi1>
    %c128_i32 = arith.constant 128 : i32
    %18 = arith.muli %1, %c128_i32 : i32
    %c160_i32 = arith.constant 160 : i32
    %19 = arith.subi %c160_i32, %18 : i32
    %20 = vector.broadcast %19 : i32 to vector<128x1xi32>
    %21 = arith.cmpi slt, %10, %20 : vector<128x1xi32>
    %22 = vector.broadcast %21 : vector<128x1xi1> to vector<128x128xi1>
    %23 = arith.andi %17, %22 : vector<128x128xi1>
    %c128_i32_5 = arith.constant 128 : i32
    %24 = arith.muli %3, %c128_i32_5 : i32
    %c160_i32_6 = arith.constant 160 : i32
    %25 = arith.subi %c160_i32_6, %24 : i32
    %26 = vector.broadcast %25 : i32 to vector<1x128xi32>
    %27 = arith.cmpi slt, %11, %26 : vector<1x128xi32>
    %28 = vector.broadcast %27 : vector<1x128xi1> to vector<128x128xi1>
    %29 = arith.andi %23, %28 : vector<128x128xi1>
    %30 = arith.index_cast %3 : i32 to index
    %c0_7 = arith.constant 0 : index
    %31 = vector.load %arg6[%30, %c0_7] : memref<2x128xi32, #tpu.memory_space<vmem>>, vector<1x128xi32>
    %c0_8 = arith.constant 0 : index
    %c0_9 = arith.constant 0 : index
    %32 = vector.load %arg5[%c0_8, %c0_9] : memref<128x1xi32, #tpu.memory_space<vmem>>, vector<128x1xi32>
    %33 = vector.broadcast %32 : vector<128x1xi32> to vector<128x128xi32>
    %34 = vector.broadcast %31 : vector<1x128xi32> to vector<128x128xi32>
    %35 = arith.cmpi eq, %33, %34 : vector<128x128xi32>
    %cst_10 = arith.constant 0.000000e+00 : f32
    %36 = vector.broadcast %cst_10 : f32 to vector<128x128xf32>
    %37 = arith.subf %36, %9 : vector<128x128xf32>
    %cst_11 = arith.constant 1.250000e+00 : f32
    %38 = vector.broadcast %cst_11 : f32 to vector<128x128xf32>
    %39 = arith.addf %37, %38 : vector<128x128xf32>
    %cst_12 = arith.constant 0.000000e+00 : f32
    %40 = vector.broadcast %cst_12 : f32 to vector<128x128xf32>
    %41 = arith.maximumf %39, %40 : vector<128x128xf32>
    %cst_13 = arith.constant 2.500000e-01 : f32
    %42 = vector.broadcast %cst_13 : f32 to vector<128x128xf32>
    %43 = arith.addf %9, %42 : vector<128x128xf32>
    %cst_14 = arith.constant 0.000000e+00 : f32
    %44 = vector.broadcast %cst_14 : f32 to vector<128x128xf32>
    %45 = arith.maximumf %43, %44 : vector<128x128xf32>
    %cst_15 = arith.constant -2.560000e+02 : f32
    %46 = vector.broadcast %cst_15 : f32 to vector<128x128xf32>
    %47 = arith.mulf %46, %41 : vector<128x128xf32>
    %cst_16 = arith.constant 7.500000e-01 : f32
    %48 = vector.broadcast %cst_16 : f32 to vector<128x128xf32>
    %49 = arith.subf %9, %48 : vector<128x128xf32>
    %50 = arith.mulf %47, %49 : vector<128x128xf32>
    %cst_17 = arith.constant 2.560000e+02 : f32
    %51 = vector.broadcast %cst_17 : f32 to vector<128x128xf32>
    %52 = arith.mulf %51, %45 : vector<128x128xf32>
    %cst_18 = arith.constant 2.500000e-01 : f32
    %53 = vector.broadcast %cst_18 : f32 to vector<128x128xf32>
    %54 = arith.subf %9, %53 : vector<128x128xf32>
    %55 = arith.mulf %52, %54 : vector<128x128xf32>
    %56 = arith.andi %35, %29 : vector<128x128xi1>
    %cst_19 = arith.constant 0xFF800000 : f32
    %57 = vector.broadcast %cst_19 : f32 to vector<128x128xf32>
    %58 = arith.select %56, %50, %57 : vector<128x128xi1>, vector<128x128xf32>
    %cst_20 = arith.constant dense<true> : vector<128x128xi1>
    %59 = arith.xori %35, %cst_20 : vector<128x128xi1>
    %60 = arith.andi %59, %29 : vector<128x128xi1>
    %cst_21 = arith.constant 0xFF800000 : f32
    %61 = vector.broadcast %cst_21 : f32 to vector<128x128xf32>
    %62 = arith.select %60, %55, %61 : vector<128x128xi1>, vector<128x128xf32>
    %c0_22 = arith.constant 0 : index
    %c0_23 = arith.constant 0 : index
    %63 = vector.load %arg8[%c0_22, %c0_23] : memref<1x128xf32, #tpu.memory_space<vmem>>, vector<1x128xf32>
    %c0_24 = arith.constant 0 : index
    %c0_25 = arith.constant 0 : index
    %64 = vector.load %arg10[%c0_24, %c0_25] : memref<1x128xf32, #tpu.memory_space<vmem>>, vector<1x128xf32>
    %cst_26 = arith.constant dense<0xFF800000> : vector<128xf32>
    %65 = vector.multi_reduction <maximumf>, %58, %cst_26 [0] : vector<128x128xf32> to vector<128xf32>
    %66 = vector.shape_cast %65 : vector<128xf32> to vector<1x128xf32>
    %67 = arith.maximumf %63, %66 : vector<1x128xf32>
    %cst_27 = arith.constant dense<0xFF800000> : vector<128xf32>
    %68 = vector.multi_reduction <maximumf>, %62, %cst_27 [0] : vector<128x128xf32> to vector<128xf32>
    %69 = vector.shape_cast %68 : vector<128xf32> to vector<1x128xf32>
    %70 = arith.maximumf %64, %69 : vector<1x128xf32>
    %cst_28 = arith.constant 0xFF800000 : f32
    %71 = vector.broadcast %cst_28 : f32 to vector<1x128xf32>
    %72 = arith.cmpf ogt, %67, %71 : vector<1x128xf32>
    %cst_29 = arith.constant 0.000000e+00 : f32
    %73 = vector.broadcast %cst_29 : f32 to vector<1x128xf32>
    %74 = arith.select %72, %67, %73 : vector<1x128xi1>, vector<1x128xf32>
    %cst_30 = arith.constant 0xFF800000 : f32
    %75 = vector.broadcast %cst_30 : f32 to vector<1x128xf32>
    %76 = arith.cmpf ogt, %70, %75 : vector<1x128xf32>
    %cst_31 = arith.constant 0.000000e+00 : f32
    %77 = vector.broadcast %cst_31 : f32 to vector<1x128xf32>
    %78 = arith.select %76, %70, %77 : vector<1x128xi1>, vector<1x128xf32>
    %79 = vector.broadcast %74 : vector<1x128xf32> to vector<128x128xf32>
    %80 = arith.subf %58, %79 : vector<128x128xf32>
    %81 = vector.broadcast %78 : vector<1x128xf32> to vector<128x128xf32>
    %82 = arith.subf %62, %81 : vector<128x128xf32>
    %83 = arith.select %35, %80, %82 : vector<128x128xi1>, vector<128x128xf32>
    %84 = math.exp %83 : vector<128x128xf32>
    %cst_32 = arith.constant 0.000000e+00 : f32
    %85 = vector.broadcast %cst_32 : f32 to vector<128x128xf32>
    %86 = arith.select %35, %84, %85 : vector<128x128xi1>, vector<128x128xf32>
    %cst_33 = arith.constant dense<0.000000e+00> : vector<128xf32>
    %87 = vector.multi_reduction <add>, %86, %cst_33 [0] : vector<128x128xf32> to vector<128xf32>
    %88 = vector.shape_cast %87 : vector<128xf32> to vector<1x128xf32>
    %cst_34 = arith.constant 0.000000e+00 : f32
    %89 = vector.broadcast %cst_34 : f32 to vector<128x128xf32>
    %90 = arith.select %35, %89, %84 : vector<128x128xi1>, vector<128x128xf32>
    %cst_35 = arith.constant dense<0.000000e+00> : vector<128xf32>
    %91 = vector.multi_reduction <add>, %90, %cst_35 [0] : vector<128x128xf32> to vector<128xf32>
    %92 = vector.shape_cast %91 : vector<128xf32> to vector<1x128xf32>
    %c0_36 = arith.constant 0 : index
    %c0_37 = arith.constant 0 : index
    %93 = vector.load %arg9[%c0_36, %c0_37] : memref<1x128xf32, #tpu.memory_space<vmem>>, vector<1x128xf32>
    %94 = arith.subf %63, %74 : vector<1x128xf32>
    %95 = math.exp %94 : vector<1x128xf32>
    %96 = arith.mulf %93, %95 : vector<1x128xf32>
    %97 = arith.addf %96, %88 : vector<1x128xf32>
    %c0_38 = arith.constant 0 : index
    %c0_39 = arith.constant 0 : index
    %98 = vector.load %arg9[%c0_38, %c0_39] : memref<1x128xf32, #tpu.memory_space<vmem>>, vector<1x128xf32>
    tpu.vector_store %arg9[%c0_38, %c0_39], %97 {strides = array<i32>} : memref<1x128xf32, #tpu.memory_space<vmem>>, vector<1x128xf32>,
    %c0_40 = arith.constant 0 : index
    %c0_41 = arith.constant 0 : index
    %99 = vector.load %arg11[%c0_40, %c0_41] : memref<1x128xf32, #tpu.memory_space<vmem>>, vector<1x128xf32>
    %100 = arith.subf %64, %78 : vector<1x128xf32>
    %101 = math.exp %100 : vector<1x128xf32>
    %102 = arith.mulf %99, %101 : vector<1x128xf32>
    %103 = arith.addf %102, %92 : vector<1x128xf32>
    %c0_42 = arith.constant 0 : index
    %c0_43 = arith.constant 0 : index
    %104 = vector.load %arg11[%c0_42, %c0_43] : memref<1x128xf32, #tpu.memory_space<vmem>>, vector<1x128xf32>
    tpu.vector_store %arg11[%c0_42, %c0_43], %103 {strides = array<i32>} : memref<1x128xf32, #tpu.memory_space<vmem>>, vector<1x128xf32>,
    %c0_44 = arith.constant 0 : index
    %c0_45 = arith.constant 0 : index
    %105 = vector.load %arg8[%c0_44, %c0_45] : memref<1x128xf32, #tpu.memory_space<vmem>>, vector<1x128xf32>
    tpu.vector_store %arg8[%c0_44, %c0_45], %67 {strides = array<i32>} : memref<1x128xf32, #tpu.memory_space<vmem>>, vector<1x128xf32>,
    %c0_46 = arith.constant 0 : index
    %c0_47 = arith.constant 0 : index
    %106 = vector.load %arg10[%c0_46, %c0_47] : memref<1x128xf32, #tpu.memory_space<vmem>>, vector<1x128xf32>
    tpu.vector_store %arg10[%c0_46, %c0_47], %70 {strides = array<i32>} : memref<1x128xf32, #tpu.memory_space<vmem>>, vector<1x128xf32>,
    %c2_i32 = arith.constant 2 : i32
    %107 = arith.cmpi eq, %arg0, %c2_i32 : i32
    %108 = arith.extui %107 : i1 to i32
    %cst_48 = arith.constant 0xFF800000 : f32
    %c0_i32_49 = arith.constant 0 : i32
    %109 = arith.cmpi ne, %108, %c0_i32_49 : i32
    scf.if %109 {
      %c0_50 = arith.constant 0 : index
      %c0_51 = arith.constant 0 : index
      %110 = vector.load %arg8[%c0_50, %c0_51] : memref<1x128xf32, #tpu.memory_space<vmem>>, vector<1x128xf32>
      %c0_52 = arith.constant 0 : index
      %c0_53 = arith.constant 0 : index
      %111 = vector.load %arg10[%c0_52, %c0_53] : memref<1x128xf32, #tpu.memory_space<vmem>>, vector<1x128xf32>
      %112 = vector.shape_cast %110 : vector<1x128xf32> to vector<1x1x128xf32>
      %cst_54 = arith.constant dense<0xFF800000> : vector<1xf32>
      %113 = vector.multi_reduction <maximumf>, %112, %cst_54 [1, 2] : vector<1x1x128xf32> to vector<1xf32>
      %114 = vector.shape_cast %113 : vector<1xf32> to vector<1x1x1xf32>
      %115 = vector.extract %114[0, 0, 0] : f32 from vector<1x1x1xf32>
      %116 = vector.shape_cast %111 : vector<1x128xf32> to vector<1x1x128xf32>
      %cst_55 = arith.constant dense<0xFF800000> : vector<1xf32>
      %117 = vector.multi_reduction <maximumf>, %116, %cst_55 [1, 2] : vector<1x1x128xf32> to vector<1xf32>
      %118 = vector.shape_cast %117 : vector<1xf32> to vector<1x1x1xf32>
      %119 = vector.extract %118[0, 0, 0] : f32 from vector<1x1x1xf32>
      %120 = arith.cmpf ogt, %115, %cst_48 : f32
      %cst_56 = arith.constant 0.000000e+00 : f32
      %121 = arith.select %120, %115, %cst_56 : f32
      %122 = arith.cmpf ogt, %119, %cst_48 : f32
      %cst_57 = arith.constant 0.000000e+00 : f32
      %123 = arith.select %122, %119, %cst_57 : f32
      %c0_58 = arith.constant 0 : index
      %c0_59 = arith.constant 0 : index
      %124 = vector.load %arg9[%c0_58, %c0_59] : memref<1x128xf32, #tpu.memory_space<vmem>>, vector<1x128xf32>
      %125 = vector.broadcast %121 : f32 to vector<1x128xf32>
      %126 = arith.subf %110, %125 : vector<1x128xf32>
      %127 = math.exp %126 : vector<1x128xf32>
      %128 = arith.mulf %124, %127 : vector<1x128xf32>
      %129 = vector.shape_cast %128 : vector<1x128xf32> to vector<1x1x128xf32>
      %cst_60 = arith.constant dense<0.000000e+00> : vector<1xf32>
      %130 = vector.multi_reduction <add>, %129, %cst_60 [1, 2] : vector<1x1x128xf32> to vector<1xf32>
      %131 = vector.shape_cast %130 : vector<1xf32> to vector<1x1x1xf32>
      %132 = vector.extract %131[0, 0, 0] : f32 from vector<1x1x1xf32>
      %c0_61 = arith.constant 0 : index
      %c0_62 = arith.constant 0 : index
      %133 = vector.load %arg11[%c0_61, %c0_62] : memref<1x128xf32, #tpu.memory_space<vmem>>, vector<1x128xf32>
      %134 = vector.broadcast %123 : f32 to vector<1x128xf32>
      %135 = arith.subf %111, %134 : vector<1x128xf32>
      %136 = math.exp %135 : vector<1x128xf32>
      %137 = arith.mulf %133, %136 : vector<1x128xf32>
      %138 = vector.shape_cast %137 : vector<1x128xf32> to vector<1x1x128xf32>
      %cst_63 = arith.constant dense<0.000000e+00> : vector<1xf32>
      %139 = vector.multi_reduction <add>, %138, %cst_63 [1, 2] : vector<1x1x128xf32> to vector<1xf32>
      %140 = vector.shape_cast %139 : vector<1xf32> to vector<1x1x1xf32>
      %141 = vector.extract %140[0, 0, 0] : f32 from vector<1x1x1xf32>
      %142 = math.log %132 : f32
      %143 = arith.addf %121, %142 : f32
      %144 = math.log %141 : f32
      %145 = arith.addf %123, %144 : f32
      %146 = arith.addf %143, %145 : f32
      %cst_64 = arith.constant 2.000000e+01 : f32
      %147 = arith.cmpf ogt, %146, %cst_64 : f32
      %cst_65 = arith.constant 2.000000e+01 : f32
      %148 = arith.minimumf %146, %cst_65 : f32
      %149 = math.exp %148 : f32
      %150 = math.log1p %149 : f32
      %151 = arith.select %147, %146, %150 : f32
      %c0_66 = arith.constant 0 : index
      %c0_67 = arith.constant 0 : index
      %152 = memref.load %arg7[%c0_66, %c0_67] : memref<1x1xf32, #tpu.memory_space<smem>>
      memref.store %151, %arg7[%c0_66, %c0_67] : memref<1x1xf32, #tpu.memory_space<smem>>
    } else {
    }
    return
  }
  func.func @transform_0(%arg0: i32, %arg1: memref<3xi32, #tpu.memory_space<smem>>, %arg2: memref<3xi32, #tpu.memory_space<smem>>) -> (i32, i32) {
    %0 = arith.index_cast %arg0 : i32 to index
    %1 = memref.load %arg1[%0] : memref<3xi32, #tpu.memory_space<smem>>
    %c0_i32 = arith.constant 0 : i32
    %c0_i32_0 = arith.constant 0 : i32
    return %1, %c0_i32 : i32, i32
  }
  func.func @transform_1(%arg0: i32, %arg1: memref<3xi32, #tpu.memory_space<smem>>, %arg2: memref<3xi32, #tpu.memory_space<smem>>) -> (i32, i32) {
    %0 = arith.index_cast %arg0 : i32 to index
    %1 = memref.load %arg2[%0] : memref<3xi32, #tpu.memory_space<smem>>
    %c0_i32 = arith.constant 0 : i32
    %c0_i32_0 = arith.constant 0 : i32
    return %1, %c0_i32 : i32, i32
  }
  func.func @transform_2(%arg0: i32, %arg1: memref<3xi32, #tpu.memory_space<smem>>, %arg2: memref<3xi32, #tpu.memory_space<smem>>) -> (i32, i32) {
    %0 = arith.index_cast %arg0 : i32 to index
    %1 = memref.load %arg1[%0] : memref<3xi32, #tpu.memory_space<smem>>
    %c0_i32 = arith.constant 0 : i32
    %c0_i32_0 = arith.constant 0 : i32
    return %1, %c0_i32 : i32, i32
  }
  func.func @transform_3(%arg0: i32, %arg1: memref<3xi32, #tpu.memory_space<smem>>, %arg2: memref<3xi32, #tpu.memory_space<smem>>) -> (i32, i32) {
    %c0_i32 = arith.constant 0 : i32
    %c0_i32_0 = arith.constant 0 : i32
    %c0_i32_1 = arith.constant 0 : i32
    return %c0_i32, %c0_i32_0 : i32, i32
  }
  func.func @transform_4(%arg0: i32, %arg1: memref<3xi32, #tpu.memory_space<smem>>, %arg2: memref<3xi32, #tpu.memory_space<smem>>) -> (i32, i32) {
    %c0_i32 = arith.constant 0 : i32
    %c0_i32_0 = arith.constant 0 : i32
    %c0_i32_1 = arith.constant 0 : i32
    return %c0_i32, %c0_i32_0 : i32, i32
  }
}

</mosaic_0001>

<llo_original>
// kernel: tpu_custom_call.1
$region0: #{tpu_custom_call.1}
  #allocation0 [shape = 'u32[]', space=smem, size = 0x4, offset = 0x4, fixed_abs, tag = 'smem constant byte address 0x4 - core index']
  #allocation1 [shape = 'u32[144,128]{1,0:T(1,128)}', space=vmem, size = 0x12000, scoped, tag = 'internal scratch']
  #allocation2 [shape = 'f32[1,128]{1,0:T(1,128)}', space=vmem, size = 0x200, scoped, tag = 'scratch operand']
  #allocation3 [shape = 'f32[1,128]{1,0:T(1,128)}', space=vmem, size = 0x200, scoped, tag = 'scratch operand']
  #allocation4 [shape = 'f32[1,128]{1,0:T(1,128)}', space=vmem, size = 0x200, scoped, tag = 'scratch operand']
  #allocation5 [shape = 'f32[1,128]{1,0:T(1,128)}', space=vmem, size = 0x200, scoped, tag = 'scratch operand']
  #allocation6 [shape = 's32[1]{0}', space=sflag, size = 0x4, scoped, tag = 'scoped memory for tpu_custom_call.1']
  #allocation7 [shape = 'u8[512]{0}', space=smem, size = 0x200, scoped, tag = 'prefetched SMEM operand 0']
  #allocation8 [shape = 'u8[512]{0}', space=smem, size = 0x200, scoped, tag = 'prefetched SMEM operand 1']
  %s0 = inlined_call_operand.vmem [shape: s32[3], index: 0, kind: input, shape index: {}]
  %s1 = inlined_call_operand.vmem [shape: s32[3], index: 1, kind: input, shape index: {}]
  %s2 = inlined_call_operand.vmem [shape: f32[256,128], index: 2, kind: input, shape index: {}]
  %s3 = inlined_call_operand.hbm [shape: f32[256,128], index: 3, kind: input, shape index: {}]
  %s4 = inlined_call_operand.vmem [shape: s32[256,1], index: 4, kind: input, shape index: {}]
  %s5 = inlined_call_operand.vmem [shape: s32[2,128], index: 5, kind: input, shape index: {}]
  %s6 = inlined_call_operand.hbm [shape: f32[1,1], index: 6, kind: output, shape index: {}]
  %s7 = sld [smem:[#allocation0]]
  $region61: #{tpu_custom_call.1} parent=0
    _
  %s9 = ssub.s32 1, %s7
  %s10 = scalar_select 0, %s9, %s7
  %s11 = sshll.u32 %s0, 4
  %s12 = int_to_ptr.vmem [resolvable:$true] %s11
  %14 = dma.vmem_to_smem %s12, 16, [#allocation7], [#allocation6]
  %s15 = sshll.u32 %s1, 4
  %s16 = int_to_ptr.vmem [resolvable:$true] %s15
  %18 = dma.vmem_to_smem %s16, 16, [#allocation8], [#allocation6]
  %19 = dma.done [#allocation6], 32
  %20 = sfence
  $region1: #{tpu_custom_call.1} parent=0
    #allocation9 [shape = 'u8[131072]{0}', space=vmem, size = 0x20000, scoped, tag = 'input window, operand 3']
    #allocation10 [shape = 's32[2]{0}', space=sflag, size = 0x8, scoped, tag = 'scoped memory for tpu_custom_call.1']
    #allocation11 [shape = 's32[2]{0}', space=sflag, size = 0x8, scoped, tag = 'scoped memory for tpu_custom_call.1']
    #allocation12 [shape = 'u8[512]{0}', space=smem, size = 0x200, scoped, tag = 'output window, operand 0, single buffered']
    %21 = vsyncpa [#allocation10], 0
    %s22 = scalar_lea.sflag [#allocation10], 1
    %23 = vsyncpa %s22, 0
    %24 = vsyncpa [#allocation11], 0
    loop: start=0, step=1, limit=5
    $region2: #{tpu_custom_call.1} parent=1 // loop_pre_header
      _
    $region3: #{tpu_custom_call.1} parent=1 // loop_header
      %s26 = sphi 0, %s30
      %p27 = scmp.ge.s32.totalorder %s26, 5
      %s38 = sphi 0, %s40
      %s41 = sphi 0, %s38
      %s42 = sphi 0, %s41
      %s58 = sphi 0, %s42
      %s66 = sphi 0, %s68
      %s69 = sphi 0, %s66
      %s70 = sphi 0, %s69
      %s86 = sphi 0, %s70
      %s94 = sphi 0, %s96
      %s97 = sphi 0, %s94
      %s98 = sphi 0, %s97
      %s114 = sphi 0, %s98
      %s118 = sphi 0, %s118
      %s120 = sphi 0, %s118
      %s121 = sphi 0, %s120
      %s135 = sphi 0, %s121
      %s139 = sphi 0, %s139
      %s141 = sphi 0, %s139
      %s142 = sphi 0, %s141
      %s156 = sphi 0, %s142
    $region4: #{tpu_custom_call.1} parent=1 // loop_header_branch
      %29 = sbr.rel (%p27) target = $region8
    $region5: #{tpu_custom_call.1} parent=1 // loop_body
      %s31 = ssub.s32 %s26, 1
      %s32 = ssub.s32 %s26, 2
      %s33 = sadd.s32 %s26, 1
      %s34 = sld [smem:[#allocation7 + %s26]]
      %s35 = sld [smem:[#allocation7 + %s33]]
      %s36 = ssub.s32 %s34, %s35
      %p37 = scmp.eq.s32.totalorder %s36, 0
      %s39 = sadd.s32 %s38, 1
      %s40 = scalar_select %p37, %s38, %s39
      %p43 = pneg %p37
      %p44 = scmp.eq.s32.totalorder %s26, 2
      %p45 = por %p43, %p44
      %p46 = scmp.ne.s32.totalorder %s38, %s41
      %p47 = scmp.eq.s32.totalorder %s26, 0
      %p48 = por %p46, %p47
      %p49 = scmp.ne.s32.totalorder %s38, %s41
      %p50 = scmp.eq.s32.totalorder %s31, 2
      %p51 = por %p49, %p50
      %p52 = scmp.ne.s32.totalorder %s41, %s42
      %p53 = scmp.eq.s32.totalorder %s31, 0
      %p54 = por %p52, %p53
      %p55 = scmp.ne.s32.totalorder %s41, %s42
      %p56 = scmp.eq.s32.totalorder %s32, 2
      %p57 = por %p55, %p56
      %p59 = scmp.ne.s32.totalorder %s42, %s58
      %p60 = scmp.eq.s32.totalorder %s32, 0
      %p61 = por %p59, %p60
      %s62 = sld [smem:[#allocation8 + %s26]]
      %s63 = sld [smem:[#allocation8 + %s33]]
      %s64 = ssub.s32 %s62, %s63
      %p65 = scmp.eq.s32.totalorder %s64, 0
      %s67 = sadd.s32 %s66, 1
      %s68 = scalar_select %p65, %s66, %s67
      %p71 = pneg %p65
      %p72 = scmp.eq.s32.totalorder %s26, 2
      %p73 = por %p71, %p72
      %p74 = scmp.ne.s32.totalorder %s66, %s69
      %p75 = scmp.eq.s32.totalorder %s26, 0
      %p76 = por %p74, %p75
      %p77 = scmp.ne.s32.totalorder %s66, %s69
      %p78 = scmp.eq.s32.totalorder %s31, 2
      %p79 = por %p77, %p78
      %p80 = scmp.ne.s32.totalorder %s69, %s70
      %p81 = scmp.eq.s32.totalorder %s31, 0
      %p82 = por %p80, %p81
      %p83 = scmp.ne.s32.totalorder %s69, %s70
      %p84 = scmp.eq.s32.totalorder %s32, 2
      %p85 = por %p83, %p84
      %p87 = scmp.ne.s32.totalorder %s70, %s86
      %p88 = scmp.eq.s32.totalorder %s32, 0
      %p89 = por %p87, %p88
      %s90 = sld [smem:[#allocation7 + %s26]]
      %s91 = sld [smem:[#allocation7 + %s33]]
      %s92 = ssub.s32 %s90, %s91
      %p93 = scmp.eq.s32.totalorder %s92, 0
      %s95 = sadd.s32 %s94, 1
      %s96 = scalar_select %p93, %s94, %s95
      %p99 = pneg %p93
      %p100 = scmp.eq.s32.totalorder %s26, 2
      %p101 = por %p99, %p100
      %p102 = scmp.ne.s32.totalorder %s94, %s97
      %p103 = scmp.eq.s32.totalorder %s26, 0
      %p104 = por %p102, %p103
      %p105 = scmp.ne.s32.totalorder %s94, %s97
      %p106 = scmp.eq.s32.totalorder %s31, 2
      %p107 = por %p105, %p106
      %p108 = scmp.ne.s32.totalorder %s97, %s98
      %p109 = scmp.eq.s32.totalorder %s31, 0
      %p110 = por %p108, %p109
      %p111 = scmp.ne.s32.totalorder %s97, %s98
      %p112 = scmp.eq.s32.totalorder %s32, 2
      %p113 = por %p111, %p112
      %p115 = scmp.ne.s32.totalorder %s98, %s114
      %p116 = scmp.eq.s32.totalorder %s32, 0
      %p117 = por %p115, %p116
      %s119 = sadd.s32 %s118, 1
      %p122 = scmp.eq.s32.totalorder %s26, 2
      %p123 = scmp.ne.s32.totalorder %s118, %s120
      %p124 = scmp.eq.s32.totalorder %s26, 0
      %p125 = por %p123, %p124
      %p126 = scmp.ne.s32.totalorder %s118, %s120
      %p127 = scmp.eq.s32.totalorder %s31, 2
      %p128 = por %p126, %p127
      %p129 = scmp.ne.s32.totalorder %s120, %s121
      %p130 = scmp.eq.s32.totalorder %s31, 0
      %p131 = por %p129, %p130
      %p132 = scmp.ne.s32.totalorder %s120, %s121
      %p133 = scmp.eq.s32.totalorder %s32, 2
      %p134 = por %p132, %p133
      %p136 = scmp.ne.s32.totalorder %s121, %s135
      %p137 = scmp.eq.s32.totalorder %s32, 0
      %p138 = por %p136, %p137
      %s140 = sadd.s32 %s139, 1
      %p143 = scmp.eq.s32.totalorder %s26, 2
      %p144 = scmp.ne.s32.totalorder %s139, %s141
      %p145 = scmp.eq.s32.totalorder %s26, 0
      %p146 = por %p144, %p145
      %p147 = scmp.ne.s32.totalorder %s139, %s141
      %p148 = scmp.eq.s32.totalorder %s31, 2
      %p149 = por %p147, %p148
      %p150 = scmp.ne.s32.totalorder %s141, %s142
      %p151 = scmp.eq.s32.totalorder %s31, 0
      %p152 = por %p150, %p151
      %p153 = scmp.ne.s32.totalorder %s141, %s142
      %p154 = scmp.eq.s32.totalorder %s32, 2
      %p155 = por %p153, %p154
      %p157 = scmp.ne.s32.totalorder %s142, %s156
      %p158 = scmp.eq.s32.totalorder %s32, 0
      %p159 = por %p157, %p158
      %p160 = scmp.le.s32.totalorder 1, %s26
      %p161 = scmp.lt.s32.totalorder %s26, 4
      %p162 = pnand %p160, %p161
      %p163 = pneg %p162
      // Predicated region
      $region9: #{tpu_custom_call.1} parent=5 // pred_check
        _
      $region10: #{tpu_custom_call.1} parent=5 // pred_check_branch
        %165 = sbr.rel (%p162) target = $region12
      $region11: #{tpu_custom_call.1} parent=5 // pred_region
        %s166 = ssub.s32 %s26, 1
        // Predicated region
        $region13: #{tpu_custom_call.1} parent=11 // pred_check
          %p167 = pneg %p131
        $region14: #{tpu_custom_call.1} parent=11 // pred_check_branch
          %169 = sbr.rel (%p167) target = $region16
        $region15: #{tpu_custom_call.1} parent=11 // pred_region
          _
        $region16: #{tpu_custom_call.1} parent=11 // pred_fallthru
          _
      $region12: #{tpu_custom_call.1} parent=5 // pred_fallthru
        _
      %p170 = scmp.lt.s32.totalorder %s26, 3
      // Predicated region
      $region17: #{tpu_custom_call.1} parent=5 // pred_check
        %p171 = pneg %p170
      $region18: #{tpu_custom_call.1} parent=5 // pred_check_branch
        %173 = sbr.rel (%p171) target = $region20
      $region19: #{tpu_custom_call.1} parent=5 // pred_region
        // Predicated region
        $region21: #{tpu_custom_call.1} parent=19 // pred_check
          %p174 = pneg %p48
        $region22: #{tpu_custom_call.1} parent=19 // pred_check_branch
          %176 = sbr.rel (%p174) target = $region24
        $region23: #{tpu_custom_call.1} parent=19 // pred_region
          %s177 = sld [smem:[#allocation7 + %s26]]
          %s178 = smul.u32 16, %s177
          %p179 = scmp.lt.s32.totalorder %s178, 31
          %s180 = scalar_select %p179, %s178, 31
          %s181 = smul.addr %s180, 8
          %s182 = scalar_lea.vmem %s2, %s181
          %s183 = sld [smem:[#allocation7 + %s26]]
          %s184 = smul.u32 16, %s183
        $region24: #{tpu_custom_call.1} parent=19 // pred_fallthru
          _
        // Predicated region
        $region25: #{tpu_custom_call.1} parent=19 // pred_check
          %p185 = pneg %p76
        $region26: #{tpu_custom_call.1} parent=19 // pred_check_branch
          %187 = sbr.rel (%p185) target = $region28
        $region27: #{tpu_custom_call.1} parent=19 // pred_region
          %s188 = sand.u32 %s66, 1
          %s189 = scalar_lea.sflag [#allocation10], %s188
          %s190 = sand.u32 %s66, 1
          %s191 = smul.addr %s190, 128
          %s192 = scalar_lea.vmem [#allocation9], %s191
          %s193 = sld [smem:[#allocation8 + %s26]]
          %s194 = smul.u32 16, %s193
          %s196 = ssub.s32 2048, 2048
          %197 = vsyncadd %s189, %s196
          %s198 = smul.addr %s194, 128
          %s199 = scalar_lea.hbm %s3, %s198
          %s200 = sshll.u32 %s192, 4
          %s201 = int_to_ptr.vmem [resolvable:$true] %s200
          %206 = dma.hbm_to_vmem [thread:$0]  %s199, 2048, %s201, %s189, 128, 128, 8
        $region28: #{tpu_custom_call.1} parent=19 // pred_fallthru
          _
        // Predicated region
        $region29: #{tpu_custom_call.1} parent=19 // pred_check
          %p207 = pneg %p104
        $region30: #{tpu_custom_call.1} parent=19 // pred_check_branch
          %209 = sbr.rel (%p207) target = $region32
        $region31: #{tpu_custom_call.1} parent=19 // pred_region
          %s210 = sld [smem:[#allocation7 + %s26]]
          %s211 = smul.u32 16, %s210
          %p212 = scmp.lt.s32.totalorder %s211, 31
          %s213 = scalar_select %p212, %s211, 31
          %s214 = smul.addr %s213, 8
          %s215 = scalar_lea.vmem %s4, %s214
          %s216 = sld [smem:[#allocation7 + %s26]]
          %s217 = smul.u32 16, %s216
        $region32: #{tpu_custom_call.1} parent=19 // pred_fallthru
          _
      $region20: #{tpu_custom_call.1} parent=5 // pred_fallthru
        _
      %p218 = scmp.le.s32.totalorder 1, %s26
      %p219 = scmp.lt.s32.totalorder %s26, 4
      %p220 = pnand %p218, %p219
      %p221 = pneg %p220
      // Predicated region
      $region33: #{tpu_custom_call.1} parent=5 // pred_check
        _
      $region34: #{tpu_custom_call.1} parent=5 // pred_check_branch
        %223 = sbr.rel (%p220) target = $region36
      $region35: #{tpu_custom_call.1} parent=5 // pred_region
        %s224 = ssub.s32 %s26, 1
        %s225 = sand.u32 %s69, 1
        %s226 = scalar_lea.sflag [#allocation10], %s225
        %s227 = sand.u32 %s69, 1
        %s228 = smul.addr %s227, 128
        %s229 = scalar_lea.vmem [#allocation9], %s228
        // Predicated region
        $region37: #{tpu_custom_call.1} parent=35 // pred_check
          %p230 = pneg %p82
        $region38: #{tpu_custom_call.1} parent=35 // pred_check_branch
          %232 = sbr.rel (%p230) target = $region40
        $region39: #{tpu_custom_call.1} parent=35 // pred_region
          %233 = dma.done %s226, 2048
        $region40: #{tpu_custom_call.1} parent=35 // pred_fallthru
          _
        %s234 = sld [smem:[#allocation7 + %s31]]
        %s235 = smul.u32 16, %s234
        %p236 = scmp.lt.s32.totalorder %s235, 31
        %s237 = scalar_select %p236, %s235, 31
        %s238 = smul.addr %s237, 8
        %s239 = scalar_lea.vmem %s2, %s238
        %p240 = pneg %p54
        %p241 = pneg %p51
        %s242 = sand.u32 %s69, 1
        %s243 = scalar_lea.sflag [#allocation10], %s242
        %s244 = sand.u32 %s69, 1
        %s245 = smul.addr %s244, 128
        %s246 = scalar_lea.vmem [#allocation9], %s245
        %p247 = pneg %p82
        %p248 = pneg %p79
        %s249 = sld [smem:[#allocation7 + %s31]]
        %s250 = smul.u32 16, %s249
        %p251 = scmp.lt.s32.totalorder %s250, 31
        %s252 = scalar_select %p251, %s250, 31
        %s253 = smul.addr %s252, 8
        %s254 = scalar_lea.vmem %s4, %s253
        %p255 = pneg %p110
        %p256 = pneg %p107
        %p257 = pneg %p131
        %p258 = pneg %p128
        %p259 = pneg %p152
        %p260 = pneg %p149
        %s261 = sld [smem:[#allocation7 + %s31]]
        %s262 = smul.u32 16, %s261
        %p263 = scmp.lt.s32.totalorder %s262, 31
        %s264 = scalar_select %p263, %s262, 31
        %s265 = smul.addr %s264, 8
        %s266 = scalar_lea.vmem %s2, %s265
        %s267 = sld [smem:[#allocation7 + %s31]]
        %s268 = smul.u32 16, %s267
        %s269 = sld [smem:[#allocation8 + %s31]]
        %s270 = smul.u32 16, %s269
        %s271 = sld [smem:[#allocation7 + %s31]]
        %s272 = smul.u32 16, %s271
        %p273 = scmp.lt.s32.totalorder %s272, 31
        %s274 = scalar_select %p273, %s272, 31
        %s275 = smul.addr %s274, 8
        %s276 = scalar_lea.vmem %s4, %s275
        %s277 = sld [smem:[#allocation7 + %s31]]
        %s278 = smul.u32 16, %s277
        %s279 = sld [smem:[#allocation7 + %s31]]
        %s280 = sld [smem:[#allocation8 + %s31]]
        %p281 = scmp.eq.s32.totalorder %s31, 0
        // Predicated region
        $region41: #{tpu_custom_call.1} parent=35 // pred_check
          %p282 = pneg %p281
        $region42: #{tpu_custom_call.1} parent=35 // pred_check_branch
          %284 = sbr.rel (%p282) target = $region44
        $region43: #{tpu_custom_call.1} parent=35 // pred_region
          %285 = vst [vmem:[#allocation2] sm:$0x1] -inf
          %286 = vst [vmem:[#allocation3] sm:$0x1] 0.0
          %287 = vst [vmem:[#allocation4] sm:$0x1] -inf
          %288 = vst [vmem:[#allocation5] sm:$0x1] 0.0
          %s289 = scalar_lea.smem [#allocation12], 0
          %290 = sst [smem:[%s289]] 0.0
        $region44: #{tpu_custom_call.1} parent=35 // pred_fallthru
          _
        %v291 = vld [vmem:[%s266] sm:$0xff]
        %v292 = vld [vmem:[%s266 + $0x8] sm:$0xff]
        %v293 = vld [vmem:[%s266 + $0x10] sm:$0xff]
        %v294 = vld [vmem:[%s266 + $0x18] sm:$0xff]
        %v295 = vld [vmem:[%s266 + $0x20] sm:$0xff]
        %v296 = vld [vmem:[%s266 + $0x28] sm:$0xff]
        %v297 = vld [vmem:[%s266 + $0x30] sm:$0xff]
        %v298 = vld [vmem:[%s266 + $0x38] sm:$0xff]
        %v299 = vld [vmem:[%s266 + $0x40] sm:$0xff]
        %v300 = vld [vmem:[%s266 + $0x48] sm:$0xff]
        %v301 = vld [vmem:[%s266 + $0x50] sm:$0xff]
        %v302 = vld [vmem:[%s266 + $0x58] sm:$0xff]
        %v303 = vld [vmem:[%s266 + $0x60] sm:$0xff]
        %v304 = vld [vmem:[%s266 + $0x68] sm:$0xff]
        %v305 = vld [vmem:[%s266 + $0x70] sm:$0xff]
        %v306 = vld [vmem:[%s266 + $0x78] sm:$0xff]
        %v307 = vld [vmem:[%s229] sm:$0xff]
        %v308 = vld [vmem:[%s229 + $0x8] sm:$0xff]
        %v309 = vld [vmem:[%s229 + $0x10] sm:$0xff]
        %v310 = vld [vmem:[%s229 + $0x18] sm:$0xff]
        %v311 = vld [vmem:[%s229 + $0x20] sm:$0xff]
        %v312 = vld [vmem:[%s229 + $0x28] sm:$0xff]
        %v313 = vld [vmem:[%s229 + $0x30] sm:$0xff]
        %v314 = vld [vmem:[%s229 + $0x38] sm:$0xff]
        %v315 = vld [vmem:[%s229 + $0x40] sm:$0xff]
        %v316 = vld [vmem:[%s229 + $0x48] sm:$0xff]
        %v317 = vld [vmem:[%s229 + $0x50] sm:$0xff]
        %v318 = vld [vmem:[%s229 + $0x58] sm:$0xff]
        %v319 = vld [vmem:[%s229 + $0x60] sm:$0xff]
        %v320 = vld [vmem:[%s229 + $0x68] sm:$0xff]
        %v321 = vld [vmem:[%s229 + $0x70] sm:$0xff]
        %v322 = vld [vmem:[%s229 + $0x78] sm:$0xff]
        %323 = vmatprep.subr.mxu0 0.0
        %324 = vmatpush1.xpose.msra.mxu0 %v307
        %325 = vmatprep.subr.mxu0 0.0
        %326 = vmatpush1.xpose.msra.mxu0 %v308
        %327 = vmatprep.subr.mxu0 0.0
        %328 = vmatpush1.xpose.msra.mxu0 %v309
        %329 = vmatprep.subr.mxu0 0.0
        %330 = vmatpush1.xpose.msra.mxu0 %v310
        %331 = vmatprep.subr.mxu0 0.0
        %332 = vmatpush1.xpose.msra.mxu0 %v311
        %333 = vmatprep.subr.mxu0 0.0
        %334 = vmatpush1.xpose.msra.mxu0 %v312
        %335 = vmatprep.subr.mxu0 0.0
        %336 = vmatpush1.xpose.msra.mxu0 %v313
        %337 = vmatprep.subr.mxu0 0.0
        %338 = vmatpush1.xpose.msra.mxu0 %v314
        %339 = vmatprep.subr.mxu0 0.0
        %340 = vmatpush1.xpose.msra.mxu0 %v315
        %341 = vmatprep.subr.mxu0 0.0
        %342 = vmatpush1.xpose.msra.mxu0 %v316
        %343 = vmatprep.subr.mxu0 0.0
        %344 = vmatpush1.xpose.msra.mxu0 %v317
        %345 = vmatprep.subr.mxu0 0.0
        %346 = vmatpush1.xpose.msra.mxu0 %v318
        %347 = vmatprep.subr.mxu0 0.0
        %348 = vmatpush1.xpose.msra.mxu0 %v319
        %349 = vmatprep.subr.mxu0 0.0
        %350 = vmatpush1.xpose.msra.mxu0 %v320
        %351 = vmatprep.subr.mxu0 0.0
        %352 = vmatpush1.xpose.msra.mxu0 %v321
        %353 = vmatprep.subr.mxu0 0.0
        %354 = vmatpush1.xpose.msra.mxu0 %v322
        %355 = vmatprep.subr.mxu0 0.0
        %356 = vmatpush1.xpose.msra.mxu0 0.0
        %357 = vmatprep.subr.mxu0 0.0
        %358 = vmatpush1.xpose.msra.mxu0 0.0
        %359 = vmatprep.subr.mxu0 0.0
        %360 = vmatpush1.xpose.msra.mxu0 0.0
        %361 = vmatprep.subr.mxu0 0.0
        %362 = vmatpush1.xpose.msra.mxu0 0.0
        %363 = vmatprep.subr.mxu0 0.0
        %364 = vmatpush1.xpose.msra.mxu0 0.0
        %365 = vmatprep.subr.mxu0 0.0
        %366 = vmatpush1.xpose.msra.mxu0 0.0
        %367 = vmatprep.subr.mxu0 0.0
        %368 = vmatpush1.xpose.msra.mxu0 0.0
        %369 = vmatprep.subr.mxu0 0.0
        %370 = vmatpush1.xpose.msra.mxu0 0.0
        %371 = vmatprep.subr.mxu0 0.0
        %372 = vmatpush1.xpose.msra.mxu0 0.0
        %373 = vmatprep.subr.mxu0 0.0
        %374 = vmatpush1.xpose.msra.mxu0 0.0
        %375 = vmatprep.subr.mxu0 0.0
        %376 = vmatpush1.xpose.msra.mxu0 0.0
        %377 = vmatprep.subr.mxu0 0.0
        %378 = vmatpush1.xpose.msra.mxu0 0.0
        %379 = vmatprep.subr.mxu0 0.0
        %380 = vmatpush1.xpose.msra.mxu0 0.0
        %381 = vmatprep.subr.mxu0 0.0
        %382 = vmatpush1.xpose.msra.mxu0 0.0
        %383 = vmatprep.subr.mxu0 0.0
        %384 = vmatpush1.xpose.msra.mxu0 0.0
        %385 = vmatprep.subr.mxu0 0.0
        %386 = vmatpush1.xpose.msra.mxu0 0.0
        %387 = vmatprep.mubr.f32.mxu0 0.0
        %388 = vmatmul.mubr.f32.gmra.mrb[0].mxu0 %v291
        %v389 = vpop.f32.mrb[0].mxu0
        %v390 = vadd.f32 0.0, %v389
        %v391 = vpop.f32.mrb[0].mxu0
        %392 = vmatprep.mubr.f32.mxu0 0.0
        %393 = vmatmul.mubr.f32.gmra.mrb[0].mxu0 %v292
        %v394 = vpop.f32.mrb[0].mxu0
        %v395 = vadd.f32 0.0, %v394
        %v396 = vpop.f32.mrb[0].mxu0
        %397 = vmatprep.mubr.f32.mxu0 0.0
        %398 = vmatmul.mubr.f32.gmra.mrb[0].mxu0 %v293
        %v399 = vpop.f32.mrb[0].mxu0
        %v400 = vadd.f32 0.0, %v399
        %v401 = vpop.f32.mrb[0].mxu0
        %402 = vmatprep.mubr.f32.mxu0 0.0
        %403 = vmatmul.mubr.f32.gmra.mrb[0].mxu0 %v294
        %v404 = vpop.f32.mrb[0].mxu0
        %v405 = vadd.f32 0.0, %v404
        %v406 = vpop.f32.mrb[0].mxu0
        %407 = vmatprep.mubr.f32.mxu0 0.0
        %408 = vmatmul.mubr.f32.gmra.mrb[0].mxu0 %v295
        %v409 = vpop.f32.mrb[0].mxu0
        %v410 = vadd.f32 0.0, %v409
        %v411 = vpop.f32.mrb[0].mxu0
        %412 = vmatprep.mubr.f32.mxu0 0.0
        %413 = vmatmul.mubr.f32.gmra.mrb[0].mxu0 %v296
        %v414 = vpop.f32.mrb[0].mxu0
        %v415 = vadd.f32 0.0, %v414
        %v416 = vpop.f32.mrb[0].mxu0
        %417 = vmatprep.mubr.f32.mxu0 0.0
        %418 = vmatmul.mubr.f32.gmra.mrb[0].mxu0 %v297
        %v419 = vpop.f32.mrb[0].mxu0
        %v420 = vadd.f32 0.0, %v419
        %v421 = vpop.f32.mrb[0].mxu0
        %422 = vmatprep.mubr.f32.mxu0 0.0
        %423 = vmatmul.mubr.f32.gmra.mrb[0].mxu0 %v298
        %v424 = vpop.f32.mrb[0].mxu0
        %v425 = vadd.f32 0.0, %v424
        %v426 = vpop.f32.mrb[0].mxu0
        %427 = vmatprep.mubr.f32.mxu0 0.0
        %428 = vmatmul.mubr.f32.gmra.mrb[0].mxu0 %v299
        %v429 = vpop.f32.mrb[0].mxu0
        %v430 = vadd.f32 0.0, %v429
        %v431 = vpop.f32.mrb[0].mxu0
        %432 = vmatprep.mubr.f32.mxu0 0.0
        %433 = vmatmul.mubr.f32.gmra.mrb[0].mxu0 %v300
        %v434 = vpop.f32.mrb[0].mxu0
        %v435 = vadd.f32 0.0, %v434
        %v436 = vpop.f32.mrb[0].mxu0
        %437 = vmatprep.mubr.f32.mxu0 0.0
        %438 = vmatmul.mubr.f32.gmra.mrb[0].mxu0 %v301
        %v439 = vpop.f32.mrb[0].mxu0
        %v440 = vadd.f32 0.0, %v439
        %v441 = vpop.f32.mrb[0].mxu0
        %442 = vmatprep.mubr.f32.mxu0 0.0
        %443 = vmatmul.mubr.f32.gmra.mrb[0].mxu0 %v302
        %v444 = vpop.f32.mrb[0].mxu0
        %v445 = vadd.f32 0.0, %v444
        %v446 = vpop.f32.mrb[0].mxu0
        %447 = vmatprep.mubr.f32.mxu0 0.0
        %448 = vmatmul.mubr.f32.gmra.mrb[0].mxu0 %v303
        %v449 = vpop.f32.mrb[0].mxu0
        %v450 = vadd.f32 0.0, %v449
        %v451 = vpop.f32.mrb[0].mxu0
        %452 = vmatprep.mubr.f32.mxu0 0.0
        %453 = vmatmul.mubr.f32.gmra.mrb[0].mxu0 %v304
        %v454 = vpop.f32.mrb[0].mxu0
        %v455 = vadd.f32 0.0, %v454
        %v456 = vpop.f32.mrb[0].mxu0
        %457 = vmatprep.mubr.f32.mxu0 0.0
        %458 = vmatmul.mubr.f32.gmra.mrb[0].mxu0 %v305
        %v459 = vpop.f32.mrb[0].mxu0
        %v460 = vadd.f32 0.0, %v459
        %v461 = vpop.f32.mrb[0].mxu0
        %462 = vmatprep.mubr.f32.mxu0 0.0
        %463 = vmatmul.mubr.f32.gmra.mrb[0].mxu0 %v306
        %v464 = vpop.f32.mrb[0].mxu0
        %v465 = vadd.f32 0.0, %v464
        %v466 = vpop.f32.mrb[0].mxu0
        %467 = vdwg.mxu0
        %v468 = vlaneseq
        %v469 = vshrl.u32 %v468, 7
        %v470 = vadd.s32 %v469, 8
        %v471 = vadd.s32 %v469, 16
        %v472 = vadd.s32 %v469, 24
        %v473 = vadd.s32 %v469, 32
        %v474 = vadd.s32 %v469, 40
        %v475 = vadd.s32 %v469, 48
        %v476 = vadd.s32 %v469, 56
        %v477 = vadd.s32 %v469, 64
        %v478 = vadd.s32 %v469, 72
        %v479 = vadd.s32 %v469, 80
        %v480 = vadd.s32 %v469, 88
        %v481 = vadd.s32 %v469, 96
        %v482 = vadd.s32 %v469, 104
        %v483 = vadd.s32 %v469, 112
        %v484 = vadd.s32 %v469, 120
        %v485 = vlaneseq
        %v486 = vand.u32 %v485, 127
        %p487 = scmp.gt.s32.totalorder %s280, %s279
        %vm488 = vcmp.gt.s32.totalorder %v486, %v469
        %vm489 = vcmp.gt.s32.totalorder %v486, %v470
        %vm490 = vcmp.gt.s32.totalorder %v486, %v471
        %vm491 = vcmp.gt.s32.totalorder %v486, %v472
        %vm492 = vcmp.gt.s32.totalorder %v486, %v473
        %vm493 = vcmp.gt.s32.totalorder %v486, %v474
        %vm494 = vcmp.gt.s32.totalorder %v486, %v475
        %vm495 = vcmp.gt.s32.totalorder %v486, %v476
        %vm496 = vcmp.gt.s32.totalorder %v486, %v477
        %vm497 = vcmp.gt.s32.totalorder %v486, %v478
        %vm498 = vcmp.gt.s32.totalorder %v486, %v479
        %vm499 = vcmp.gt.s32.totalorder %v486, %v480
        %vm500 = vcmp.gt.s32.totalorder %v486, %v481
        %vm501 = vcmp.gt.s32.totalorder %v486, %v482
        %vm502 = vcmp.gt.s32.totalorder %v486, %v483
        %vm503 = vcmp.gt.s32.totalorder %v486, %v484
        %s504 = scalar_select %p487, 1, 0
        %v505 = vstv %s504
        %vm506 = vcmp.eq.s32.totalorder %v505, 1
        %vm507 = vmor %vm506, %vm488
        %vm508 = vmor %vm506, %vm489
        %vm509 = vmor %vm506, %vm490
        %vm510 = vmor %vm506, %vm491
        %vm511 = vmor %vm506, %vm492
        %vm512 = vmor %vm506, %vm493
        %vm513 = vmor %vm506, %vm494
        %vm514 = vmor %vm506, %vm495
        %vm515 = vmor %vm506, %vm496
        %vm516 = vmor %vm506, %vm497
        %vm517 = vmor %vm506, %vm498
        %vm518 = vmor %vm506, %vm499
        %vm519 = vmor %vm506, %vm500
        %vm520 = vmor %vm506, %vm501
        %vm521 = vmor %vm506, %vm502
        %vm522 = vmor %vm506, %vm503
        %s523 = smul.u32 %s279, 128
        %s524 = ssub.s32 160, %s523
        %v525 = vstv %s524
        %vm526 = vcmp.lt.s32.totalorder %v469, %v525
        %vm527 = vcmp.lt.s32.totalorder %v470, %v525
        %vm528 = vcmp.lt.s32.totalorder %v471, %v525
        %vm529 = vcmp.lt.s32.totalorder %v472, %v525
        %vm530 = vcmp.lt.s32.totalorder %v473, %v525
        %vm531 = vcmp.lt.s32.totalorder %v474, %v525
        %vm532 = vcmp.lt.s32.totalorder %v475, %v525
        %vm533 = vcmp.lt.s32.totalorder %v476, %v525
        %vm534 = vcmp.lt.s32.totalorder %v477, %v525
        %vm535 = vcmp.lt.s32.totalorder %v478, %v525
        %vm536 = vcmp.lt.s32.totalorder %v479, %v525
        %vm537 = vcmp.lt.s32.totalorder %v480, %v525
        %vm538 = vcmp.lt.s32.totalorder %v481, %v525
        %vm539 = vcmp.lt.s32.totalorder %v482, %v525
        %vm540 = vcmp.lt.s32.totalorder %v483, %v525
        %vm541 = vcmp.lt.s32.totalorder %v484, %v525
        %v542 = vsel %vm526, 1, 0
        %v543 = vsel %vm527, 1, 0
        %v544 = vsel %vm528, 1, 0
        %v545 = vsel %vm529, 1, 0
        %v546 = vsel %vm530, 1, 0
        %v547 = vsel %vm531, 1, 0
        %v548 = vsel %vm532, 1, 0
        %v549 = vsel %vm533, 1, 0
        %v550 = vsel %vm534, 1, 0
        %v551 = vsel %vm535, 1, 0
        %v552 = vsel %vm536, 1, 0
        %v553 = vsel %vm537, 1, 0
        %v554 = vsel %vm538, 1, 0
        %v555 = vsel %vm539, 1, 0
        %v556 = vsel %vm540, 1, 0
        %v557 = vsel %vm541, 1, 0
        %vm558 = vcmp.eq.s32.totalorder %v542, 1
        %vm559 = vcmp.eq.s32.totalorder %v543, 1
        %vm560 = vcmp.eq.s32.totalorder %v544, 1
        %vm561 = vcmp.eq.s32.totalorder %v545, 1
        %vm562 = vcmp.eq.s32.totalorder %v546, 1
        %vm563 = vcmp.eq.s32.totalorder %v547, 1
        %vm564 = vcmp.eq.s32.totalorder %v548, 1
        %vm565 = vcmp.eq.s32.totalorder %v549, 1
        %vm566 = vcmp.eq.s32.totalorder %v550, 1
        %vm567 = vcmp.eq.s32.totalorder %v551, 1
        %vm568 = vcmp.eq.s32.totalorder %v552, 1
        %vm569 = vcmp.eq.s32.totalorder %v553, 1
        %vm570 = vcmp.eq.s32.totalorder %v554, 1
        %vm571 = vcmp.eq.s32.totalorder %v555, 1
        %vm572 = vcmp.eq.s32.totalorder %v556, 1
        %vm573 = vcmp.eq.s32.totalorder %v557, 1
        %vm574 = vmand %vm507, %vm558
        %vm575 = vmand %vm508, %vm559
        %vm576 = vmand %vm509, %vm560
        %vm577 = vmand %vm510, %vm561
        %vm578 = vmand %vm511, %vm562
        %vm579 = vmand %vm512, %vm563
        %vm580 = vmand %vm513, %vm564
        %vm581 = vmand %vm514, %vm565
        %vm582 = vmand %vm515, %vm566
        %vm583 = vmand %vm516, %vm567
        %vm584 = vmand %vm517, %vm568
        %vm585 = vmand %vm518, %vm569
        %vm586 = vmand %vm519, %vm570
        %vm587 = vmand %vm520, %vm571
        %vm588 = vmand %vm521, %vm572
        %vm589 = vmand %vm522, %vm573
        %s590 = smul.u32 %s280, 128
        %s591 = ssub.s32 160, %s590
        %v592 = vstv %s591
        %vm593 = vcmp.lt.s32.totalorder %v486, %v592
        %v594 = vsel %vm593, 1, 0
        %vm595 = vcmp.eq.s32.totalorder %v594, 1
        %vm596 = vmand %vm574, %vm595
        %vm597 = vmand %vm575, %vm595
        %vm598 = vmand %vm576, %vm595
        %vm599 = vmand %vm577, %vm595
        %vm600 = vmand %vm578, %vm595
        %vm601 = vmand %vm579, %vm595
        %vm602 = vmand %vm580, %vm595
        %vm603 = vmand %vm581, %vm595
        %vm604 = vmand %vm582, %vm595
        %vm605 = vmand %vm583, %vm595
        %vm606 = vmand %vm584, %vm595
        %vm607 = vmand %vm585, %vm595
        %vm608 = vmand %vm586, %vm595
        %vm609 = vmand %vm587, %vm595
        %vm610 = vmand %vm588, %vm595
        %vm611 = vmand %vm589, %vm595
        %s612 = scalar_lea.vmem %s5, %s280
        %v613 = vld [vmem:[%s612] sm:$0x1]
        %v614 = vld [vmem:[%s276] sm:$0xff]
        %v615 = vld [vmem:[%s276 + $0x8] sm:$0xff]
        %v616 = vld [vmem:[%s276 + $0x10] sm:$0xff]
        %v617 = vld [vmem:[%s276 + $0x18] sm:$0xff]
        %v618 = vld [vmem:[%s276 + $0x20] sm:$0xff]
        %v619 = vld [vmem:[%s276 + $0x28] sm:$0xff]
        %v620 = vld [vmem:[%s276 + $0x30] sm:$0xff]
        %v621 = vld [vmem:[%s276 + $0x38] sm:$0xff]
        %v622 = vld [vmem:[%s276 + $0x40] sm:$0xff]
        %v623 = vld [vmem:[%s276 + $0x48] sm:$0xff]
        %v624 = vld [vmem:[%s276 + $0x50] sm:$0xff]
        %v625 = vld [vmem:[%s276 + $0x58] sm:$0xff]
        %v626 = vld [vmem:[%s276 + $0x60] sm:$0xff]
        %v627 = vld [vmem:[%s276 + $0x68] sm:$0xff]
        %v628 = vld [vmem:[%s276 + $0x70] sm:$0xff]
        %v629 = vld [vmem:[%s276 + $0x78] sm:$0xff]
        %630 = vset.pattern.permute.xlu0 0
        %631 = vperm.xlu0 %630, %v614
        %v632 = vpop.permute.xlu0 %631
        %633 = vset.pattern.permute.xlu0 0
        %634 = vperm.xlu0 %633, %v615
        %v635 = vpop.permute.xlu0 %634
        %636 = vset.pattern.permute.xlu0 0
        %637 = vperm.xlu0 %636, %v616
        %v638 = vpop.permute.xlu0 %637
        %639 = vset.pattern.permute.xlu0 0
        %640 = vperm.xlu0 %639, %v617
        %v641 = vpop.permute.xlu0 %640
        %642 = vset.pattern.permute.xlu0 0
        %643 = vperm.xlu0 %642, %v618
        %v644 = vpop.permute.xlu0 %643
        %645 = vset.pattern.permute.xlu0 0
        %646 = vperm.xlu0 %645, %v619
        %v647 = vpop.permute.xlu0 %646
        %648 = vset.pattern.permute.xlu0 0
        %649 = vperm.xlu0 %648, %v620
        %v650 = vpop.permute.xlu0 %649
        %651 = vset.pattern.permute.xlu0 0
        %652 = vperm.xlu0 %651, %v621
        %v653 = vpop.permute.xlu0 %652
        %654 = vset.pattern.permute.xlu0 0
        %655 = vperm.xlu0 %654, %v622
        %v656 = vpop.permute.xlu0 %655
        %657 = vset.pattern.permute.xlu0 0
        %658 = vperm.xlu0 %657, %v623
        %v659 = vpop.permute.xlu0 %658
        %660 = vset.pattern.permute.xlu0 0
        %661 = vperm.xlu0 %660, %v624
        %v662 = vpop.permute.xlu0 %661
        %663 = vset.pattern.permute.xlu0 0
        %664 = vperm.xlu0 %663, %v625
        %v665 = vpop.permute.xlu0 %664
        %666 = vset.pattern.permute.xlu0 0
        %667 = vperm.xlu0 %666, %v626
        %v668 = vpop.permute.xlu0 %667
        %669 = vset.pattern.permute.xlu0 0
        %670 = vperm.xlu0 %669, %v627
        %v671 = vpop.permute.xlu0 %670
        %672 = vset.pattern.permute.xlu0 0
        %673 = vperm.xlu0 %672, %v628
        %v674 = vpop.permute.xlu0 %673
        %675 = vset.pattern.permute.xlu0 0
        %676 = vperm.xlu0 %675, %v629
        %v677 = vpop.permute.xlu0 %676
        %v678 = vlaneseq
        %v679 = vshrl.u32 %v678, 7
        %v680 = vsub.s32 0, %v679
        %v681 = vrot.slane %v613, %v680
        %vm682 = vcmp.eq.s32.totalorder %v632, %v681
        %vm683 = vcmp.eq.s32.totalorder %v635, %v681
        %vm684 = vcmp.eq.s32.totalorder %v638, %v681
        %vm685 = vcmp.eq.s32.totalorder %v641, %v681
        %vm686 = vcmp.eq.s32.totalorder %v644, %v681
        %vm687 = vcmp.eq.s32.totalorder %v647, %v681
        %vm688 = vcmp.eq.s32.totalorder %v650, %v681
        %vm689 = vcmp.eq.s32.totalorder %v653, %v681
        %vm690 = vcmp.eq.s32.totalorder %v656, %v681
        %vm691 = vcmp.eq.s32.totalorder %v659, %v681
        %vm692 = vcmp.eq.s32.totalorder %v662, %v681
        %vm693 = vcmp.eq.s32.totalorder %v665, %v681
        %vm694 = vcmp.eq.s32.totalorder %v668, %v681
        %vm695 = vcmp.eq.s32.totalorder %v671, %v681
        %vm696 = vcmp.eq.s32.totalorder %v674, %v681
        %vm697 = vcmp.eq.s32.totalorder %v677, %v681
        %v698 = vsub.f32 0.0, %v390
        %v699 = vsub.f32 0.0, %v395
        %v700 = vsub.f32 0.0, %v400
        %v701 = vsub.f32 0.0, %v405
        %v702 = vsub.f32 0.0, %v410
        %v703 = vsub.f32 0.0, %v415
        %v704 = vsub.f32 0.0, %v420
        %v705 = vsub.f32 0.0, %v425
        %v706 = vsub.f32 0.0, %v430
        %v707 = vsub.f32 0.0, %v435
        %v708 = vsub.f32 0.0, %v440
        %v709 = vsub.f32 0.0, %v445
        %v710 = vsub.f32 0.0, %v450
        %v711 = vsub.f32 0.0, %v455
        %v712 = vsub.f32 0.0, %v460
        %v713 = vsub.f32 0.0, %v465
        %v714 = vadd.f32 %v698, 1.25
        %v715 = vadd.f32 %v699, 1.25
        %v716 = vadd.f32 %v700, 1.25
        %v717 = vadd.f32 %v701, 1.25
        %v718 = vadd.f32 %v702, 1.25
        %v719 = vadd.f32 %v703, 1.25
        %v720 = vadd.f32 %v704, 1.25
        %v721 = vadd.f32 %v705, 1.25
        %v722 = vadd.f32 %v706, 1.25
        %v723 = vadd.f32 %v707, 1.25
        %v724 = vadd.f32 %v708, 1.25
        %v725 = vadd.f32 %v709, 1.25
        %v726 = vadd.f32 %v710, 1.25
        %v727 = vadd.f32 %v711, 1.25
        %v728 = vadd.f32 %v712, 1.25
        %v729 = vadd.f32 %v713, 1.25
        %v730 = vmax.f32 %v714, 0.0
        %v731 = vmax.f32 %v715, 0.0
        %v732 = vmax.f32 %v716, 0.0
        %v733 = vmax.f32 %v717, 0.0
        %v734 = vmax.f32 %v718, 0.0
        %v735 = vmax.f32 %v719, 0.0
        %v736 = vmax.f32 %v720, 0.0
        %v737 = vmax.f32 %v721, 0.0
        %v738 = vmax.f32 %v722, 0.0
        %v739 = vmax.f32 %v723, 0.0
        %v740 = vmax.f32 %v724, 0.0
        %v741 = vmax.f32 %v725, 0.0
        %v742 = vmax.f32 %v726, 0.0
        %v743 = vmax.f32 %v727, 0.0
        %v744 = vmax.f32 %v728, 0.0
        %v745 = vmax.f32 %v729, 0.0
        %v746 = vadd.f32 %v390, 0.25
        %v747 = vadd.f32 %v395, 0.25
        %v748 = vadd.f32 %v400, 0.25
        %v749 = vadd.f32 %v405, 0.25
        %v750 = vadd.f32 %v410, 0.25
        %v751 = vadd.f32 %v415, 0.25
        %v752 = vadd.f32 %v420, 0.25
        %v753 = vadd.f32 %v425, 0.25
        %v754 = vadd.f32 %v430, 0.25
        %v755 = vadd.f32 %v435, 0.25
        %v756 = vadd.f32 %v440, 0.25
        %v757 = vadd.f32 %v445, 0.25
        %v758 = vadd.f32 %v450, 0.25
        %v759 = vadd.f32 %v455, 0.25
        %v760 = vadd.f32 %v460, 0.25
        %v761 = vadd.f32 %v465, 0.25
        %v762 = vmax.f32 %v746, 0.0
        %v763 = vmax.f32 %v747, 0.0
        %v764 = vmax.f32 %v748, 0.0
        %v765 = vmax.f32 %v749, 0.0
        %v766 = vmax.f32 %v750, 0.0
        %v767 = vmax.f32 %v751, 0.0
        %v768 = vmax.f32 %v752, 0.0
        %v769 = vmax.f32 %v753, 0.0
        %v770 = vmax.f32 %v754, 0.0
        %v771 = vmax.f32 %v755, 0.0
        %v772 = vmax.f32 %v756, 0.0
        %v773 = vmax.f32 %v757, 0.0
        %v774 = vmax.f32 %v758, 0.0
        %v775 = vmax.f32 %v759, 0.0
        %v776 = vmax.f32 %v760, 0.0
        %v777 = vmax.f32 %v761, 0.0
        %v778 = vmul.f32 %v730, -256.0
        %v779 = vmul.f32 %v731, -256.0
        %v780 = vmul.f32 %v732, -256.0
        %v781 = vmul.f32 %v733, -256.0
        %v782 = vmul.f32 %v734, -256.0
        %v783 = vmul.f32 %v735, -256.0
        %v784 = vmul.f32 %v736, -256.0
        %v785 = vmul.f32 %v737, -256.0
        %v786 = vmul.f32 %v738, -256.0
        %v787 = vmul.f32 %v739, -256.0
        %v788 = vmul.f32 %v740, -256.0
        %v789 = vmul.f32 %v741, -256.0
        %v790 = vmul.f32 %v742, -256.0
        %v791 = vmul.f32 %v743, -256.0
        %v792 = vmul.f32 %v744, -256.0
        %v793 = vmul.f32 %v745, -256.0
        %v794 = vsub.f32 %v390, 0.75
        %v795 = vsub.f32 %v395, 0.75
        %v796 = vsub.f32 %v400, 0.75
        %v797 = vsub.f32 %v405, 0.75
        %v798 = vsub.f32 %v410, 0.75
        %v799 = vsub.f32 %v415, 0.75
        %v800 = vsub.f32 %v420, 0.75
        %v801 = vsub.f32 %v425, 0.75
        %v802 = vsub.f32 %v430, 0.75
        %v803 = vsub.f32 %v435, 0.75
        %v804 = vsub.f32 %v440, 0.75
        %v805 = vsub.f32 %v445, 0.75
        %v806 = vsub.f32 %v450, 0.75
        %v807 = vsub.f32 %v455, 0.75
        %v808 = vsub.f32 %v460, 0.75
        %v809 = vsub.f32 %v465, 0.75
        %v810 = vmul.f32 %v778, %v794
        %v811 = vmul.f32 %v779, %v795
        %v812 = vmul.f32 %v780, %v796
        %v813 = vmul.f32 %v781, %v797
        %v814 = vmul.f32 %v782, %v798
        %v815 = vmul.f32 %v783, %v799
        %v816 = vmul.f32 %v784, %v800
        %v817 = vmul.f32 %v785, %v801
        %v818 = vmul.f32 %v786, %v802
        %v819 = vmul.f32 %v787, %v803
        %v820 = vmul.f32 %v788, %v804
        %v821 = vmul.f32 %v789, %v805
        %v822 = vmul.f32 %v790, %v806
        %v823 = vmul.f32 %v791, %v807
        %v824 = vmul.f32 %v792, %v808
        %v825 = vmul.f32 %v793, %v809
        %v826 = vmul.f32 %v762, 256.0
        %v827 = vmul.f32 %v763, 256.0
        %v828 = vmul.f32 %v764, 256.0
        %v829 = vmul.f32 %v765, 256.0
        %v830 = vmul.f32 %v766, 256.0
        %v831 = vmul.f32 %v767, 256.0
        %v832 = vmul.f32 %v768, 256.0
        %v833 = vmul.f32 %v769, 256.0
        %v834 = vmul.f32 %v770, 256.0
        %v835 = vmul.f32 %v771, 256.0
        %v836 = vmul.f32 %v772, 256.0
        %v837 = vmul.f32 %v773, 256.0
        %v838 = vmul.f32 %v774, 256.0
        %v839 = vmul.f32 %v775, 256.0
        %v840 = vmul.f32 %v776, 256.0
        %v841 = vmul.f32 %v777, 256.0
        %v842 = vsub.f32 %v390, 0.25
        %v843 = vsub.f32 %v395, 0.25
        %v844 = vsub.f32 %v400, 0.25
        %v845 = vsub.f32 %v405, 0.25
        %v846 = vsub.f32 %v410, 0.25
        %v847 = vsub.f32 %v415, 0.25
        %v848 = vsub.f32 %v420, 0.25
        %v849 = vsub.f32 %v425, 0.25
        %v850 = vsub.f32 %v430, 0.25
        %v851 = vsub.f32 %v435, 0.25
        %v852 = vsub.f32 %v440, 0.25
        %v853 = vsub.f32 %v445, 0.25
        %v854 = vsub.f32 %v450, 0.25
        %v855 = vsub.f32 %v455, 0.25
        %v856 = vsub.f32 %v460, 0.25
        %v857 = vsub.f32 %v465, 0.25
        %v858 = vmul.f32 %v826, %v842
        %v859 = vmul.f32 %v827, %v843
        %v860 = vmul.f32 %v828, %v844
        %v861 = vmul.f32 %v829, %v845
        %v862 = vmul.f32 %v830, %v846
        %v863 = vmul.f32 %v831, %v847
        %v864 = vmul.f32 %v832, %v848
        %v865 = vmul.f32 %v833, %v849
        %v866 = vmul.f32 %v834, %v850
        %v867 = vmul.f32 %v835, %v851
        %v868 = vmul.f32 %v836, %v852
        %v869 = vmul.f32 %v837, %v853
        %v870 = vmul.f32 %v838, %v854
        %v871 = vmul.f32 %v839, %v855
        %v872 = vmul.f32 %v840, %v856
        %v873 = vmul.f32 %v841, %v857
        %vm874 = vmand %vm682, %vm596
        %vm875 = vmand %vm683, %vm597
        %vm876 = vmand %vm684, %vm598
        %vm877 = vmand %vm685, %vm599
        %vm878 = vmand %vm686, %vm600
        %vm879 = vmand %vm687, %vm601
        %vm880 = vmand %vm688, %vm602
        %vm881 = vmand %vm689, %vm603
        %vm882 = vmand %vm690, %vm604
        %vm883 = vmand %vm691, %vm605
        %vm884 = vmand %vm692, %vm606
        %vm885 = vmand %vm693, %vm607
        %vm886 = vmand %vm694, %vm608
        %vm887 = vmand %vm695, %vm609
        %vm888 = vmand %vm696, %vm610
        %vm889 = vmand %vm697, %vm611
        %v890 = vsel %vm874, %v810, -inf
        %v891 = vsel %vm875, %v811, -inf
        %v892 = vsel %vm876, %v812, -inf
        %v893 = vsel %vm877, %v813, -inf
        %v894 = vsel %vm878, %v814, -inf
        %v895 = vsel %vm879, %v815, -inf
        %v896 = vsel %vm880, %v816, -inf
        %v897 = vsel %vm881, %v817, -inf
        %v898 = vsel %vm882, %v818, -inf
        %v899 = vsel %vm883, %v819, -inf
        %v900 = vsel %vm884, %v820, -inf
        %v901 = vsel %vm885, %v821, -inf
        %v902 = vsel %vm886, %v822, -inf
        %v903 = vsel %vm887, %v823, -inf
        %v904 = vsel %vm888, %v824, -inf
        %v905 = vsel %vm889, %v825, -inf
        %vm906 = vmxor %vm682, 1
        %vm907 = vmxor %vm683, 1
        %vm908 = vmxor %vm684, 1
        %vm909 = vmxor %vm685, 1
        %vm910 = vmxor %vm686, 1
        %vm911 = vmxor %vm687, 1
        %vm912 = vmxor %vm688, 1
        %vm913 = vmxor %vm689, 1
        %vm914 = vmxor %vm690, 1
        %vm915 = vmxor %vm691, 1
        %vm916 = vmxor %vm692, 1
        %vm917 = vmxor %vm693, 1
        %vm918 = vmxor %vm694, 1
        %vm919 = vmxor %vm695, 1
        %vm920 = vmxor %vm696, 1
        %vm921 = vmxor %vm697, 1
        %vm922 = vmand %vm906, %vm596
        %vm923 = vmand %vm907, %vm597
        %vm924 = vmand %vm908, %vm598
        %vm925 = vmand %vm909, %vm599
        %vm926 = vmand %vm910, %vm600
        %vm927 = vmand %vm911, %vm601
        %vm928 = vmand %vm912, %vm602
        %vm929 = vmand %vm913, %vm603
        %vm930 = vmand %vm914, %vm604
        %vm931 = vmand %vm915, %vm605
        %vm932 = vmand %vm916, %vm606
        %vm933 = vmand %vm917, %vm607
        %vm934 = vmand %vm918, %vm608
        %vm935 = vmand %vm919, %vm609
        %vm936 = vmand %vm920, %vm610
        %vm937 = vmand %vm921, %vm611
        %v938 = vsel %vm922, %v858, -inf
        %v939 = vsel %vm923, %v859, -inf
        %v940 = vsel %vm924, %v860, -inf
        %v941 = vsel %vm925, %v861, -inf
        %v942 = vsel %vm926, %v862, -inf
        %v943 = vsel %vm927, %v863, -inf
        %v944 = vsel %vm928, %v864, -inf
        %v945 = vsel %vm929, %v865, -inf
        %v946 = vsel %vm930, %v866, -inf
        %v947 = vsel %vm931, %v867, -inf
        %v948 = vsel %vm932, %v868, -inf
        %v949 = vsel %vm933, %v869, -inf
        %v950 = vsel %vm934, %v870, -inf
        %v951 = vsel %vm935, %v871, -inf
        %v952 = vsel %vm936, %v872, -inf
        %v953 = vsel %vm937, %v873, -inf
        %v954 = vld [vmem:[#allocation2] sm:$0x1]
        %v955 = vld [vmem:[#allocation4] sm:$0x1]
        %v956 = vmax.f32 %v890, %v894
        %v957 = vmax.f32 %v891, %v895
        %v958 = vmax.f32 %v892, %v896
        %v959 = vmax.f32 %v893, %v897
        %v960 = vmax.f32 %v956, %v898
        %v961 = vmax.f32 %v957, %v899
        %v962 = vmax.f32 %v958, %v900
        %v963 = vmax.f32 %v959, %v901
        %v964 = vmax.f32 %v960, %v902
        %v965 = vmax.f32 %v961, %v903
        %v966 = vmax.f32 %v962, %v904
        %v967 = vmax.f32 %v963, %v905
        %v968 = vmax.f32 %v964, %v965
        %v969 = vmax.f32 %v966, %v967
        %v970 = vmax.f32 %v968, %v969
        %v971 = vrot.slane %v970, 4
        %v972 = vmax.f32 %v970, %v971
        %v973 = vrot.slane %v972, 2
        %v974 = vmax.f32 %v972, %v973
        %v975 = vrot.slane %v974, 1
        %v976 = vmax.f32 %v974, %v975
        %v977 = vmax.f32 %v954, %v976
        %v978 = vmax.f32 %v938, %v942
        %v979 = vmax.f32 %v939, %v943
        %v980 = vmax.f32 %v940, %v944
        %v981 = vmax.f32 %v941, %v945
        %v982 = vmax.f32 %v978, %v946
        %v983 = vmax.f32 %v979, %v947
        %v984 = vmax.f32 %v980, %v948
        %v985 = vmax.f32 %v981, %v949
        %v986 = vmax.f32 %v982, %v950
        %v987 = vmax.f32 %v983, %v951
        %v988 = vmax.f32 %v984, %v952
        %v989 = vmax.f32 %v985, %v953
        %v990 = vmax.f32 %v986, %v987
        %v991 = vmax.f32 %v988, %v989
        %v992 = vmax.f32 %v990, %v991
        %v993 = vrot.slane %v992, 4
        %v994 = vmax.f32 %v992, %v993
        %v995 = vrot.slane %v994, 2
        %v996 = vmax.f32 %v994, %v995
        %v997 = vrot.slane %v996, 1
        %v998 = vmax.f32 %v996, %v997
        %v999 = vmax.f32 %v955, %v998
        %vm1000 = vcmp.gt.f32.partialorder %v977, -inf
        %v1001 = vsel %vm1000, %v977, 0.0
        %vm1002 = vcmp.gt.f32.partialorder %v999, -inf
        %v1003 = vsel %vm1002, %v999, 0.0
        %v1005 = vlaneseq
        %v1006 = vshrl.u32 %v1005, 7
        %v1007 = vsub.s32 0, %v1006
        %v1008 = vrot.slane %v1001, %v1007
        %v1010 = vsub.f32 %v890, %v1008
        %v1011 = vsub.f32 %v891, %v1008
        %v1012 = vsub.f32 %v892, %v1008
        %v1013 = vsub.f32 %v893, %v1008
        %v1014 = vsub.f32 %v894, %v1008
        %v1015 = vsub.f32 %v895, %v1008
        %v1016 = vsub.f32 %v896, %v1008
        %v1017 = vsub.f32 %v897, %v1008
        %v1018 = vsub.f32 %v898, %v1008
        %v1019 = vsub.f32 %v899, %v1008
        %v1020 = vsub.f32 %v900, %v1008
        %v1021 = vsub.f32 %v901, %v1008
        %v1022 = vsub.f32 %v902, %v1008
        %v1023 = vsub.f32 %v903, %v1008
        %v1024 = vsub.f32 %v904, %v1008
        %v1025 = vsub.f32 %v905, %v1008
        %v1027 = vlaneseq
        %v1028 = vshrl.u32 %v1027, 7
        %v1029 = vsub.s32 0, %v1028
        %v1030 = vrot.slane %v1003, %v1029
        %v1032 = vsub.f32 %v938, %v1030
        %v1033 = vsub.f32 %v939, %v1030
        %v1034 = vsub.f32 %v940, %v1030
        %v1035 = vsub.f32 %v941, %v1030
        %v1036 = vsub.f32 %v942, %v1030
        %v1037 = vsub.f32 %v943, %v1030
        %v1038 = vsub.f32 %v944, %v1030
        %v1039 = vsub.f32 %v945, %v1030
        %v1040 = vsub.f32 %v946, %v1030
        %v1041 = vsub.f32 %v947, %v1030
        %v1042 = vsub.f32 %v948, %v1030
        %v1043 = vsub.f32 %v949, %v1030
        %v1044 = vsub.f32 %v950, %v1030
        %v1045 = vsub.f32 %v951, %v1030
        %v1046 = vsub.f32 %v952, %v1030
        %v1047 = vsub.f32 %v953, %v1030
        %v1048 = vsel %vm682, %v1010, %v1032
        %v1049 = vsel %vm683, %v1011, %v1033
        %v1050 = vsel %vm684, %v1012, %v1034
        %v1051 = vsel %vm685, %v1013, %v1035
        %v1052 = vsel %vm686, %v1014, %v1036
        %v1053 = vsel %vm687, %v1015, %v1037
        %v1054 = vsel %vm688, %v1016, %v1038
        %v1055 = vsel %vm689, %v1017, %v1039
        %v1056 = vsel %vm690, %v1018, %v1040
        %v1057 = vsel %vm691, %v1019, %v1041
        %v1058 = vsel %vm692, %v1020, %v1042
        %v1059 = vsel %vm693, %v1021, %v1043
        %v1060 = vsel %vm694, %v1022, %v1044
        %v1061 = vsel %vm695, %v1023, %v1045
        %v1062 = vsel %vm696, %v1024, %v1046
        %v1063 = vsel %vm697, %v1025, %v1047
        %v1064 = vmul.f32 %v1048, 1.442695
        %v1065 = vpow.pop %v1064
        %v1066 = vmul.f32 %v1049, 1.442695
        %v1067 = vpow.pop %v1066
        %v1068 = vmul.f32 %v1050, 1.442695
        %v1069 = vpow.pop %v1068
        %v1070 = vmul.f32 %v1051, 1.442695
        %v1071 = vpow.pop %v1070
        %v1072 = vmul.f32 %v1052, 1.442695
        %v1073 = vpow.pop %v1072
        %v1074 = vmul.f32 %v1053, 1.442695
        %v1075 = vpow.pop %v1074
        %v1076 = vmul.f32 %v1054, 1.442695
        %v1077 = vpow.pop %v1076
        %v1078 = vmul.f32 %v1055, 1.442695
        %v1079 = vpow.pop %v1078
        %v1080 = vmul.f32 %v1056, 1.442695
        %v1081 = vpow.pop %v1080
        %v1082 = vmul.f32 %v1057, 1.442695
        %v1083 = vpow.pop %v1082
        %v1084 = vmul.f32 %v1058, 1.442695
        %v1085 = vpow.pop %v1084
        %v1086 = vmul.f32 %v1059, 1.442695
        %v1087 = vpow.pop %v1086
        %v1088 = vmul.f32 %v1060, 1.442695
        %v1089 = vpow.pop %v1088
        %v1090 = vmul.f32 %v1061, 1.442695
        %v1091 = vpow.pop %v1090
        %v1092 = vmul.f32 %v1062, 1.442695
        %v1093 = vpow.pop %v1092
        %v1094 = vmul.f32 %v1063, 1.442695
        %v1095 = vpow.pop %v1094
        %v1096 = vsel %vm682, %v1065, 0.0
        %v1097 = vsel %vm683, %v1067, 0.0
        %v1098 = vsel %vm684, %v1069, 0.0
        %v1099 = vsel %vm685, %v1071, 0.0
        %v1100 = vsel %vm686, %v1073, 0.0
        %v1101 = vsel %vm687, %v1075, 0.0
        %v1102 = vsel %vm688, %v1077, 0.0
        %v1103 = vsel %vm689, %v1079, 0.0
        %v1104 = vsel %vm690, %v1081, 0.0
        %v1105 = vsel %vm691, %v1083, 0.0
        %v1106 = vsel %vm692, %v1085, 0.0
        %v1107 = vsel %vm693, %v1087, 0.0
        %v1108 = vsel %vm694, %v1089, 0.0
        %v1109 = vsel %vm695, %v1091, 0.0
        %v1110 = vsel %vm696, %v1093, 0.0
        %v1111 = vsel %vm697, %v1095, 0.0
        %v1112 = vadd.f32 %v1096, %v1097
        %v1113 = vadd.f32 %v1112, %v1098
        %v1114 = vadd.f32 %v1113, %v1099
        %v1115 = vadd.f32 %v1114, %v1100
        %v1116 = vadd.f32 %v1115, %v1101
        %v1117 = vadd.f32 %v1116, %v1102
        %v1118 = vadd.f32 %v1117, %v1103
        %v1119 = vadd.f32 %v1118, %v1104
        %v1120 = vadd.f32 %v1119, %v1105
        %v1121 = vadd.f32 %v1120, %v1106
        %v1122 = vadd.f32 %v1121, %v1107
        %v1123 = vadd.f32 %v1122, %v1108
        %v1124 = vadd.f32 %v1123, %v1109
        %v1125 = vadd.f32 %v1124, %v1110
        %v1126 = vadd.f32 %v1125, %v1111
        %v1127 = vrot.slane %v1126, 4
        %v1128 = vadd.f32 %v1126, %v1127
        %v1129 = vrot.slane %v1128, 2
        %v1130 = vadd.f32 %v1128, %v1129
        %v1131 = vrot.slane %v1130, 1
        %v1132 = vadd.f32 %v1130, %v1131
        %v1133 = vsel %vm682, 0.0, %v1065
        %v1134 = vsel %vm683, 0.0, %v1067
        %v1135 = vsel %vm684, 0.0, %v1069
        %v1136 = vsel %vm685, 0.0, %v1071
        %v1137 = vsel %vm686, 0.0, %v1073
        %v1138 = vsel %vm687, 0.0, %v1075
        %v1139 = vsel %vm688, 0.0, %v1077
        %v1140 = vsel %vm689, 0.0, %v1079
        %v1141 = vsel %vm690, 0.0, %v1081
        %v1142 = vsel %vm691, 0.0, %v1083
        %v1143 = vsel %vm692, 0.0, %v1085
        %v1144 = vsel %vm693, 0.0, %v1087
        %v1145 = vsel %vm694, 0.0, %v1089
        %v1146 = vsel %vm695, 0.0, %v1091
        %v1147 = vsel %vm696, 0.0, %v1093
        %v1148 = vsel %vm697, 0.0, %v1095
        %v1149 = vadd.f32 %v1133, %v1134
        %v1150 = vadd.f32 %v1149, %v1135
        %v1151 = vadd.f32 %v1150, %v1136
        %v1152 = vadd.f32 %v1151, %v1137
        %v1153 = vadd.f32 %v1152, %v1138
        %v1154 = vadd.f32 %v1153, %v1139
        %v1155 = vadd.f32 %v1154, %v1140
        %v1156 = vadd.f32 %v1155, %v1141
        %v1157 = vadd.f32 %v1156, %v1142
        %v1158 = vadd.f32 %v1157, %v1143
        %v1159 = vadd.f32 %v1158, %v1144
        %v1160 = vadd.f32 %v1159, %v1145
        %v1161 = vadd.f32 %v1160, %v1146
        %v1162 = vadd.f32 %v1161, %v1147
        %v1163 = vadd.f32 %v1162, %v1148
        %v1164 = vrot.slane %v1163, 4
        %v1165 = vadd.f32 %v1163, %v1164
        %v1166 = vrot.slane %v1165, 2
        %v1167 = vadd.f32 %v1165, %v1166
        %v1168 = vrot.slane %v1167, 1
        %v1169 = vadd.f32 %v1167, %v1168
        %v1170 = vld [vmem:[#allocation3] sm:$0x1]
        %v1171 = vsub.f32 %v954, %v1001
        %v1172 = vmul.f32 %v1171, 1.442695
        %v1173 = vpow.pop %v1172
        %v1174 = vmul.f32 %v1170, %v1173
        %v1175 = vadd.f32 %v1174, %v1132
        %1176 = vst [vmem:[#allocation3] sm:$0x1] %v1175
        %v1177 = vld [vmem:[#allocation5] sm:$0x1]
        %v1178 = vsub.f32 %v955, %v1003
        %v1179 = vmul.f32 %v1178, 1.442695
        %v1180 = vpow.pop %v1179
        %v1181 = vmul.f32 %v1177, %v1180
        %v1182 = vadd.f32 %v1181, %v1169
        %1183 = vst [vmem:[#allocation5] sm:$0x1] %v1182
        %1184 = vst [vmem:[#allocation2] sm:$0x1] %v977
        %1185 = vst [vmem:[#allocation4] sm:$0x1] %v999
        %p1186 = scmp.eq.s32.totalorder %s31, 2
        // Predicated region
        $region45: #{tpu_custom_call.1} parent=35 // pred_check
          %p1187 = pneg %p1186
        $region46: #{tpu_custom_call.1} parent=35 // pred_check_branch
          %1189 = sbr.rel (%p1187) target = $region48
        $region47: #{tpu_custom_call.1} parent=35 // pred_region
          %v1190 = vld [vmem:[#allocation2] sm:$0x1]
          %v1191 = vld [vmem:[#allocation4] sm:$0x1]
          %vm1192 = vcmask 1040384
          %v1193 = vsel %vm1192, %v1190, -inf
          %1194 = vmax.xlane.f32.xlu0 %v1193
          %v1195 = vpop.xlane.xlu0 %1194
          %v1196 = vrot.slane %v1195, 4
          %v1197 = vmax.f32 %v1195, %v1196
          %v1198 = vrot.slane %v1197, 2
          %v1199 = vmax.f32 %v1197, %v1198
          %v1200 = vrot.slane %v1199, 1
          %v1201 = vmax.f32 %v1199, %v1200
          %s1202 = vtos %v1201
          %v1203 = vsel %vm1192, %v1191, -inf
          %1204 = vmax.xlane.f32.xlu0 %v1203
          %v1205 = vpop.xlane.xlu0 %1204
          %v1206 = vrot.slane %v1205, 4
          %v1207 = vmax.f32 %v1205, %v1206
          %v1208 = vrot.slane %v1207, 2
          %v1209 = vmax.f32 %v1207, %v1208
          %v1210 = vrot.slane %v1209, 1
          %v1211 = vmax.f32 %v1209, %v1210
          %s1212 = vtos %v1211
          %p1213 = scmp.gt.f32.partialorder %s1202, -inf
          %s1214 = scalar_select %p1213, %s1202, 0.0
          %p1215 = scmp.gt.f32.partialorder %s1212, -inf
          %s1216 = scalar_select %p1215, %s1212, 0.0
          %v1217 = vld [vmem:[#allocation3] sm:$0x1]
          %v1218 = vstv %s1214
          %v1219 = vsub.f32 %v1190, %v1218
          %v1220 = vmul.f32 %v1219, 1.442695
          %v1221 = vpow.pop %v1220
          %v1222 = vmul.f32 %v1217, %v1221
          %v1223 = vsel %vm1192, %v1222, 0.0
          %1224 = vadd.xlane.f32.xlu0 %v1223
          %v1225 = vpop.xlane.xlu0 %1224
          %v1226 = vrot.slane %v1225, 4
          %v1227 = vadd.f32 %v1225, %v1226
          %v1228 = vrot.slane %v1227, 2
          %v1229 = vadd.f32 %v1227, %v1228
          %v1230 = vrot.slane %v1229, 1
          %v1231 = vadd.f32 %v1229, %v1230
          %s1232 = vtos %v1231
          %v1233 = vld [vmem:[#allocation5] sm:$0x1]
          %v1234 = vstv %s1216
          %v1235 = vsub.f32 %v1191, %v1234
          %v1236 = vmul.f32 %v1235, 1.442695
          %v1237 = vpow.pop %v1236
          %v1238 = vmul.f32 %v1233, %v1237
          %v1239 = vsel %vm1192, %v1238, 0.0
          %1240 = vadd.xlane.f32.xlu0 %v1239
          %v1241 = vpop.xlane.xlu0 %1240
          %v1242 = vrot.slane %v1241, 4
          %v1243 = vadd.f32 %v1241, %v1242
          %v1244 = vrot.slane %v1243, 2
          %v1245 = vadd.f32 %v1243, %v1244
          %v1246 = vrot.slane %v1245, 1
          %v1247 = vadd.f32 %v1245, %v1246
          %s1248 = vtos %v1247
          %v1249 = vstv %s1232
          %v1250 = vlog2.pop %v1249
          %v1251 = vmul.f32 %v1250, 0.6931472
          %s1252 = vtos %v1251
          %s1253 = sadd.f32 %s1214, %s1252
          %v1254 = vstv %s1248
          %v1255 = vlog2.pop %v1254
          %v1256 = vmul.f32 %v1255, 0.6931472
          %s1257 = vtos %v1256
          %s1258 = sadd.f32 %s1216, %s1257
          %s1259 = sadd.f32 %s1253, %s1258
          %p1260 = scmp.gt.f32.partialorder %s1259, 20.0
          %s1261 = smin.f32 %s1259, 20.0
          %v1262 = vstv %s1261
          %v1263 = vmul.f32 %v1262, 1.442695
          %v1264 = vpow.pop %v1263
          %s1265 = vtos %v1264
          %v1266 = vstv %s1265
          %v1267 = vadd.f32 %v1266, 1.0
          %v1268 = vlog2.pop %v1267
          %v1269 = vmul.f32 %v1268, 0.6931472
          %v1270 = vmul.f32 -0.5, %v1266
          %v1271 = vadd.f32 %v1270, 1.0
          %v1272 = vmul.f32 %v1271, %v1266
          %v1273 = vand.u32 2147483647, %v1266
          %vm1274 = vcmp.lt.f32.partialorder %v1273, 0.0004427343
          %v1275 = vsel %vm1274, %v1272, %v1269
          %s1276 = vtos %v1275
          %s1277 = scalar_select %p1260, %s1259, %s1276
          %s1278 = scalar_lea.smem [#allocation12], 0
          %1279 = sst [smem:[%s1278]] %s1277
        $region48: #{tpu_custom_call.1} parent=35 // pred_fallthru
          _
        // Predicated region
        $region49: #{tpu_custom_call.1} parent=35 // pred_check
          %p1280 = pneg %p149
        $region50: #{tpu_custom_call.1} parent=35 // pred_check_branch
          %1282 = sbr.rel (%p1280) target = $region52
        $region51: #{tpu_custom_call.1} parent=35 // pred_region
          %s1284 = ssub.s32 16, 16
          %1285 = vsyncadd [#allocation11], %s1284
          %1288 = dma.smem_to_hbm [#allocation12], 16, %s6, [#allocation11]
        $region52: #{tpu_custom_call.1} parent=35 // pred_fallthru
          _
        // Predicated region
        $region53: #{tpu_custom_call.1} parent=35 // pred_check
          %p1289 = pneg %p149
        $region54: #{tpu_custom_call.1} parent=35 // pred_check_branch
          %1291 = sbr.rel (%p1289) target = $region56
        $region55: #{tpu_custom_call.1} parent=35 // pred_region
          %1292 = dma.done [#allocation11], 16
        $region56: #{tpu_custom_call.1} parent=35 // pred_fallthru
          _
        %1293 = sfence
      $region36: #{tpu_custom_call.1} parent=5 // pred_fallthru
        _
      %p1294 = scmp.le.s32.totalorder 2, %s26
      // Predicated region
      $region57: #{tpu_custom_call.1} parent=5 // pred_check
        %p1295 = pneg %p1294
      $region58: #{tpu_custom_call.1} parent=5 // pred_check_branch
        %1297 = sbr.rel (%p1295) target = $region60
      $region59: #{tpu_custom_call.1} parent=5 // pred_region
        %s1298 = ssub.s32 %s26, 2
      $region60: #{tpu_custom_call.1} parent=5 // pred_fallthru
        _
    $region6: #{tpu_custom_call.1} parent=1 // loop_footer
      %s30 = sadd.s32 1, %s26
    $region7: #{tpu_custom_call.1} parent=1 // loop_footer_branch
      %25 = sbr.rel target = $region3
    $region8: #{tpu_custom_call.1} parent=1 // loop_exit
      _
    %1299 = vsyncpa [#allocation10], 1
    %s1300 = scalar_lea.sflag [#allocation10], 1
    %1301 = vsyncpa %s1300, 1
    %1302 = vsyncpa [#allocation11], 1
    %s1303 = scalar_lea.sflag [#allocation11], 1
    %1304 = vsyncpa %s1303, 1

</llo_original>
